<compile_context>
chip_gen: v6e
topology: v6e:2x2x1
jax: 0.10.0
libtpu: 0.0.40
codegen_flags: <defaults>
</compile_context>

<pallas_src>
import math

import jax
import jax.numpy as jnp
from jax.experimental import pallas as pl
from jax.experimental.pallas import tpu as pltpu

# ----------------------------- model hyper-params -----------------------------
NUM_ITEMS   = 32      # vocabulary of items
EMBED_DIM   = 32
NUM_HEADS   = 4
HEAD_DIM    = EMBED_DIM // NUM_HEADS
NUM_BLOCKS  = 2
MAX_SEQ_LEN = 16
FFN_DIM     = 4 * EMBED_DIM   # == 128, exactly one lane tile
LN_EPS      = 1e-5
LANE        = 128             # lane-tile width / segment stride inside w_big
OUT_PAD     = 128             # lane-dense padded output head width

BATCH   = 2
SEQ_LEN = 8


# --------------------------------- kernel ------------------------------------
def recommender_kernel(x_ref, mask_ref, hm_ref, seg_ref,
                       wbig_ref, w2_ref, bias_ref, wout_ref, fin_ref,
                       out_ref):
    E, H = EMBED_DIM, NUM_HEADS
    x = x_ref[...]                      # (N, E) f32 flattened batch*seq rows
    mask_bd = mask_ref[...]             # (N, H*N)  additive mask, tiled per head
    hm = hm_ref[...]                    # (H*N, E)  head block-diagonal mask
    seg = seg_ref[...]                  # (H*N, H*N) segment-sum (block ones)

    def layer_norm(v, g, b):
        mu = jnp.mean(v, axis=-1, keepdims=True)
        var = jnp.mean((v - mu) * (v - mu), axis=-1, keepdims=True)
        return (v - mu) * jax.lax.rsqrt(var + LN_EPS) * g + b

    qk_dims = (((1,), (1,)), ((), ()))  # contract last dims: q @ k_bd^T

    for blk in range(NUM_BLOCKS):       # static unroll (NUM_BLOCKS == 2)
        wblk = wbig_ref[blk]            # (E, 5*128): [wq*scale | wk | wv | wo | w1]
        bias = bias_ref[blk]            # (8, 3*128) packed bias / LN rows
        ln1_g = bias[2:3, :E]; ln1_b = bias[3:4, :E]
        ln2_g = bias[4:5, :E]; ln2_b = bias[5:6, :E]
        bo    = bias[6:7, :E]; b2    = bias[7:8, :E]
        b1    = bias[1:2, :FFN_DIM]

        # ---- multi-head self-attention (heads fused via block-diagonal K/V) ----
        xn = layer_norm(x, ln1_g, ln1_b)
        qkv = jnp.dot(xn, wblk[:, :3 * LANE],
                      preferred_element_type=jnp.float32) + bias[0:1, :]  # (N, 384)
        q = qkv[:, 0:E]                       # already scaled by 1/sqrt(Dh)
        k = qkv[:, LANE:LANE + E]             # lane-aligned slice starts
        v = qkv[:, 2 * LANE:2 * LANE + E]

        # K_bd / V_bd: row r holds head (r // N)'s slice of key/value position
        # (r mod N); other head columns zeroed by hm.
        k_bd = jnp.concatenate([k] * H, axis=0) * hm      # (H*N, E)
        v_bd = jnp.concatenate([v] * H, axis=0) * hm      # (H*N, E)

        s = jax.lax.dot_general(q, k_bd, qk_dims,
                                preferred_element_type=jnp.float32)       # (N, H*N)
        s = s + mask_bd
        # Single global row max; softmax is shift-invariant within each head
        # segment, so this is numerically equivalent to a per-head max here
        # (scores are O(1), no underflow risk; -1e30 cross-seq entries exp to 0).
        m = jnp.max(s, axis=-1, keepdims=True)
        e = jnp.exp(s - m)
        l_bd = jnp.dot(e, seg, preferred_element_type=jnp.float32)        # per-head sums
        p = e * pl.reciprocal(l_bd, approx=False)         # exact divide (1e-4 tol)
        attn = jnp.dot(p, v_bd, preferred_element_type=jnp.float32)       # (N, E), heads concat'd
        attn = jnp.dot(attn, wblk[:, 3 * LANE:3 * LANE + E],
                       preferred_element_type=jnp.float32) + bo           # W_O
        x = x + attn                          # residual (dropout = identity)

        # ---------------------------- feed-forward ----------------------------
        xn = layer_norm(x, ln2_g, ln2_b)
        h1 = jnp.dot(xn, wblk[:, 4 * LANE:5 * LANE],
                     preferred_element_type=jnp.float32) + b1             # (N, 128)
        h1 = jnp.maximum(h1, 0.0)
        ff = jnp.dot(h1, w2_ref[blk], preferred_element_type=jnp.float32) + b2
        x = x + ff

    # ---- final LayerNorm + (lane-padded, dense-store) output projection ----
    xn = layer_norm(x, fin_ref[0:1, :E], fin_ref[1:2, :E])
    out_ref[...] = jnp.dot(xn, wout_ref[...],
                           preferred_element_type=jnp.float32) + fin_ref[2:3, :]


# --------------------------------- wrapper ------------------------------------
def _pad_lanes(a, width):
    pad = width - a.shape[-1]
    if pad == 0:
        return a
    return jnp.pad(a, [(0, 0)] * (a.ndim - 1) + [(0, pad)])


def recommender_forward(sequences, params, seqs_per_step=None):
    """sequences: (B, S) int32 item ids.  Returns (B, S, NUM_ITEMS) float32 logits."""
    B, S = sequences.shape
    E, H, Dh = EMBED_DIM, NUM_HEADS, HEAD_DIM
    if seqs_per_step is None:
        # Single grid step (whole batch folded into rows).  Only split into more
        # grid steps (e.g. seqs_per_step = B // 2 for v7x megacore) when per-TC
        # rows clearly exceed the ~0.35us per-grid-step overhead (hundreds of rows),
        # and cap rows per step (~128-256) to bound the (N,N) score intermediates.
        seqs_per_step = B
    assert B % seqs_per_step == 0
    N = seqs_per_step * S

    # embedding gather + positional add kept in glue (no dense hot path in-kernel)
    item_emb = jnp.take(params["item_table"], sequences, axis=0)       # (B, S, E)
    pos_emb = params["pos_table"][:S]                                  # (S, E)
    x = (item_emb + pos_emb[None]).astype(jnp.float32).reshape(B * S, E)

    # ---- pack weights: every in-kernel slice starts on a 128-lane boundary ----
    scale = 1.0 / math.sqrt(Dh)                 # folded into wq / bq here
    w_big = jnp.concatenate([
        _pad_lanes(params["wq"] * scale, LANE),
        _pad_lanes(params["wk"], LANE),
        _pad_lanes(params["wv"], LANE),
        _pad_lanes(params["wo"], LANE),
        params["w1"],                           # FFN_DIM == 128 already
    ], axis=-1)                                                        # (nb, E, 640)
    w2 = params["w2"]                                                  # (nb, 128, E)

    b_qkv = jnp.concatenate([
        _pad_lanes(params["bq"] * scale, LANE),
        _pad_lanes(params["bk"], LANE),
        _pad_lanes(params["bv"], LANE),
    ], axis=-1)                                                        # (nb, 1, 384)
    bias_rows = jnp.concatenate([
        b_qkv,                                   # row 0 : fused qkv bias (lane-aligned)
        _pad_lanes(params["b1"], 3 * LANE),      # row 1 : ffn bias 1
        _pad_lanes(params["ln1_g"], 3 * LANE),   # row 2
        _pad_lanes(params["ln1_b"], 3 * LANE),   # row 3
        _pad_lanes(params["ln2_g"], 3 * LANE),   # row 4
        _pad_lanes(params["ln2_b"], 3 * LANE),   # row 5
        _pad_lanes(params["bo"], 3 * LANE),      # row 6
        _pad_lanes(params["b2"], 3 * LANE),      # row 7
    ], axis=1)                                                         # (nb, 8, 384)

    w_out_pad = _pad_lanes(params["w_out"], OUT_PAD)                   # (E, 128)
    fin = jnp.concatenate([
        _pad_lanes(params["lnf_g"], OUT_PAD),
        _pad_lanes(params["lnf_b"], OUT_PAD),
        _pad_lanes(params["b_out"], OUT_PAD),
    ], axis=0)                                                         # (3, 128)

    # ---- constant masks, precomputed once and resident across grid steps ----
    row = jnp.arange(N)[:, None]
    col = jnp.arange(N)[None, :]
    same_seq = (row // S) == (col // S)
    # Faithful to PyTorch float attn_mask: +1 for col<=row, +0 otherwise (ADDED,
    # not causal-masking); -1e30 separates different sequences in the folded batch.
    base_mask = jnp.where(same_seq,
                          jnp.where(col <= row, 1.0, 0.0),
                          -1e30).astype(jnp.float32)
    mask_bd = jnp.tile(base_mask, (1, H))                              # (N, H*N)
    r = jnp.arange(H * N)
    headmask = ((jnp.arange(E)[None, :] // Dh) == (r[:, None] // N)
                ).astype(jnp.float32)                                  # (H*N, E)
    seg_sum = ((r[:, None] // N) == (r[None, :] // N)
               ).astype(jnp.float32)                                   # (H*N, H*N)

    consts = [mask_bd, headmask, seg_sum, w_big, w2, bias_rows, w_out_pad, fin]

    in_specs = [pl.BlockSpec((N, E), lambda g: (g, 0))]
    for c in consts:
        in_specs.append(pl.BlockSpec(c.shape, lambda g, n=c.ndim: (0,) * n))
    out_spec = pl.BlockSpec((N, OUT_PAD), lambda g: (g, 0))

    out = pl.pallas_call(
        recommender_kernel,
        out_shape=jax.ShapeDtypeStruct((B * S, OUT_PAD), jnp.float32),
        grid=(B // seqs_per_step,),
        in_specs=in_specs,
        out_specs=out_spec,
        compiler_params=pltpu.CompilerParams(
            dimension_semantics=("parallel",)),
    )(x, *consts)
    return out[:, :NUM_ITEMS].reshape(B, S, NUM_ITEMS)


# ----------------------------- pure-JAX reference ------------------------------
def reference_forward(sequences, params):
    B, S = sequences.shape
    item_emb = jnp.take(params["item_table"], sequences, axis=0)
    x = item_emb + params["pos_table"][:S][None, :, :]

    row = jnp.arange(S)[:, None]
    col = jnp.arange(S)[None, :]
    add_mask = jnp.where(col <= row, 1.0, 0.0).astype(jnp.float32)

    def ln(v, g, b):
        mu = jnp.mean(v, axis=-1, keepdims=True)
        var = jnp.mean((v - mu) ** 2, axis=-1, keepdims=True)
        return (v - mu) / jnp.sqrt(var + LN_EPS) * g + b

    scale = 1.0 / math.sqrt(HEAD_DIM)
    for blk in range(NUM_BLOCKS):
        xn = ln(x, params["ln1_g"][blk], params["ln1_b"][blk])
        q = xn @ params["wq"][blk] + params["bq"][blk]
        k = xn @ params["wk"][blk] + params["bk"][blk]
        v = xn @ params["wv"][blk] + params["bv"][blk]
        q = q.reshape(B, S, NUM_HEADS, HEAD_DIM).transpose(0, 2, 1, 3)
        k = k.reshape(B, S, NUM_HEADS, HEAD_DIM).transpose(0, 2, 1, 3)
        v = v.reshape(B, S, NUM_HEADS, HEAD_DIM).transpose(0, 2, 1, 3)
        scores = jnp.einsum("bhqd,bhkd->bhqk", q, k) * scale + add_mask[None, None]
        p = jax.nn.softmax(scores, axis=-1)
        attn = jnp.einsum("bhqk,bhkd->bhqd", p, v).transpose(0, 2, 1, 3).reshape(B, S, EMBED_DIM)
        attn = attn @ params["wo"][blk] + params["bo"][blk]
        x = x + attn
        xn = ln(x, params["ln2_g"][blk], params["ln2_b"][blk])
        ff = jax.nn.relu(xn @ params["w1"][blk] + params["b1"][blk]) @ params["w2"][blk] + params["b2"][blk]
        x = x + ff
    xn = ln(x, params["lnf_g"], params["lnf_b"])
    return xn @ params["w_out"] + params["b_out"]


# ----------------------------- deterministic init ------------------------------
def init_params(key):
    ks = jax.random.split(key, 16)
    std = 0.05
    p = {
        "item_table": std * jax.random.normal(ks[0], (NUM_ITEMS + 1, EMBED_DIM), jnp.float32),
        "pos_table":  std * jax.random.normal(ks[1], (MAX_SEQ_LEN, EMBED_DIM), jnp.float32),
        # LayerNorms use module defaults (gamma=1, beta=0); _init_weights leaves them untouched.
        "ln1_g": jnp.ones((NUM_BLOCKS, 1, EMBED_DIM), jnp.float32),
        "ln1_b": jnp.zeros((NUM_BLOCKS, 1, EMBED_DIM), jnp.float32),
        "ln2_g": jnp.ones((NUM_BLOCKS, 1, EMBED_DIM), jnp.float32),
        "ln2_b": jnp.zeros((NUM_BLOCKS, 1, EMBED_DIM), jnp.float32),
        "lnf_g": jnp.ones((1, EMBED_DIM), jnp.float32),
        "lnf_b": jnp.zeros((1, EMBED_DIM), jnp.float32),
        # attention projections, stored (in, out) — i.e. already transposed vs torch
        "wq": std * jax.random.normal(ks[2], (NUM_BLOCKS, EMBED_DIM, EMBED_DIM), jnp.float32),
        "wk": std * jax.random.normal(ks[3], (NUM_BLOCKS, EMBED_DIM, EMBED_DIM), jnp.float32),
        "wv": std * jax.random.normal(ks[4], (NUM_BLOCKS, EMBED_DIM, EMBED_DIM), jnp.float32),
        "wo": std * jax.random.normal(ks[5], (NUM_BLOCKS, EMBED_DIM, EMBED_DIM), jnp.float32),
        "bq": std * jax.random.normal(ks[6], (NUM_BLOCKS, 1, EMBED_DIM), jnp.float32),
        "bk": std * jax.random.normal(ks[7], (NUM_BLOCKS, 1, EMBED_DIM), jnp.float32),
        "bv": std * jax.random.normal(ks[8], (NUM_BLOCKS, 1, EMBED_DIM), jnp.float32),
        "bo": std * jax.random.normal(ks[9], (NUM_BLOCKS, 1, EMBED_DIM), jnp.float32),
        # feed-forward
        "w1": std * jax.random.normal(ks[10], (NUM_BLOCKS, EMBED_DIM, FFN_DIM), jnp.float32),
        "b1": std * jax.random.normal(ks[11], (NUM_BLOCKS, 1, FFN_DIM), jnp.float32),
        "w2": std * jax.random.normal(ks[12], (NUM_BLOCKS, FFN_DIM, EMBED_DIM), jnp.float32),
        "b2": std * jax.random.normal(ks[13], (NUM_BLOCKS, 1, EMBED_DIM), jnp.float32),
        # output head (in, out)
        "w_out": std * jax.random.normal(ks[14], (EMBED_DIM, NUM_ITEMS), jnp.float32),
        "b_out": std * jax.random.normal(ks[15], (1, NUM_ITEMS), jnp.float32),
    }
    return p


# ----------------------------------- main --------------------------------------
if __name__ == "__main__":
    key = jax.random.PRNGKey(0)
    k_param, k_seq = jax.random.split(key)
    params = init_params(k_param)
    sequences = jax.random.randint(k_seq, (BATCH, SEQ_LEN), 1, NUM_ITEMS + 1, dtype=jnp.int32)

    logits = recommender_forward(sequences, params)
    logits = jax.block_until_ready(logits)

    ref = reference_forward(sequences, params)
    assert logits.shape == (BATCH, SEQ_LEN, NUM_ITEMS)
    assert jnp.allclose(logits, ref, atol=1e-4, rtol=1e-4), (
        f"max abs diff = {jnp.max(jnp.abs(logits - ref))}")

    print("KERNEL_OK")
</pallas_src>

<mosaic_0001>
module attributes {stable_mosaic.version = 11 : i64} {
  func.func @recommender_kernel(%arg0: i32, %arg1: memref<16x32xf32, #tpu.memory_space<vmem>>, %arg2: memref<16x64xf32, #tpu.memory_space<vmem>>, %arg3: memref<64x32xf32, #tpu.memory_space<vmem>>, %arg4: memref<64x64xf32, #tpu.memory_space<vmem>>, %arg5: memref<2x32x640xf32, #tpu.memory_space<vmem>>, %arg6: memref<2x128x32xf32, #tpu.memory_space<vmem>>, %arg7: memref<2x8x384xf32, #tpu.memory_space<vmem>>, %arg8: memref<32x128xf32, #tpu.memory_space<vmem>>, %arg9: memref<3x128xf32, #tpu.memory_space<vmem>>, %arg10: memref<16x128xf32, #tpu.memory_space<vmem>>) attributes {dimension_semantics = [#tpu.dimension_semantics<parallel>], iteration_bounds = array<i64: 1>, scalar_prefetch = 0 : i64, scratch_operands = 0 : i64, tpu.core_type = #tpu.core_type<tc>, window_params = [{transform_indices = @transform_0, window_bounds = array<i64: 16, 32>}, {pipeline_mode = #tpu.pipeline_mode<synchronous>, transform_indices = @transform_1, window_bounds = array<i64: 16, 64>}, {pipeline_mode = #tpu.pipeline_mode<synchronous>, transform_indices = @transform_2, window_bounds = array<i64: 64, 32>}, {pipeline_mode = #tpu.pipeline_mode<synchronous>, transform_indices = @transform_3, window_bounds = array<i64: 64, 64>}, {pipeline_mode = #tpu.pipeline_mode<synchronous>, transform_indices = @transform_4, window_bounds = array<i64: 2, 32, 640>}, {pipeline_mode = #tpu.pipeline_mode<synchronous>, transform_indices = @transform_5, window_bounds = array<i64: 2, 128, 32>}, {pipeline_mode = #tpu.pipeline_mode<synchronous>, transform_indices = @transform_6, window_bounds = array<i64: 2, 8, 384>}, {pipeline_mode = #tpu.pipeline_mode<synchronous>, transform_indices = @transform_7, window_bounds = array<i64: 32, 128>}, {pipeline_mode = #tpu.pipeline_mode<synchronous>, transform_indices = @transform_8, window_bounds = array<i64: 3, 128>}, {transform_indices = @transform_9, window_bounds = array<i64: 16, 128>}]} {
    %c0 = arith.constant 0 : index
    %c0_0 = arith.constant 0 : index
    %0 = vector.load %arg1[%c0, %c0_0] : memref<16x32xf32, #tpu.memory_space<vmem>>, vector<16x32xf32>
    %c0_1 = arith.constant 0 : index
    %c0_2 = arith.constant 0 : index
    %1 = vector.load %arg2[%c0_1, %c0_2] : memref<16x64xf32, #tpu.memory_space<vmem>>, vector<16x64xf32>
    %c0_3 = arith.constant 0 : index
    %c0_4 = arith.constant 0 : index
    %2 = vector.load %arg3[%c0_3, %c0_4] : memref<64x32xf32, #tpu.memory_space<vmem>>, vector<64x32xf32>
    %c0_5 = arith.constant 0 : index
    %c0_6 = arith.constant 0 : index
    %3 = vector.load %arg4[%c0_5, %c0_6] : memref<64x64xf32, #tpu.memory_space<vmem>>, vector<64x64xf32>
    %c0_7 = arith.constant 0 : index
    %c0_8 = arith.constant 0 : index
    %c0_9 = arith.constant 0 : index
    %4 = vector.load %arg5[%c0_7, %c0_8, %c0_9] : memref<2x32x640xf32, #tpu.memory_space<vmem>>, vector<1x32x640xf32>
    %5 = vector.shape_cast %4 : vector<1x32x640xf32> to vector<32x640xf32>
    %c0_10 = arith.constant 0 : index
    %c0_11 = arith.constant 0 : index
    %c0_12 = arith.constant 0 : index
    %6 = vector.load %arg7[%c0_10, %c0_11, %c0_12] : memref<2x8x384xf32, #tpu.memory_space<vmem>>, vector<1x8x384xf32>
    %7 = vector.shape_cast %6 : vector<1x8x384xf32> to vector<8x384xf32>
    %8 = vector.extract_strided_slice %7 {offsets = [2, 0], sizes = [1, 32], strides = [1, 1]} : vector<8x384xf32> to vector<1x32xf32>
    %9 = vector.extract_strided_slice %7 {offsets = [3, 0], sizes = [1, 32], strides = [1, 1]} : vector<8x384xf32> to vector<1x32xf32>
    %10 = vector.extract_strided_slice %7 {offsets = [4, 0], sizes = [1, 32], strides = [1, 1]} : vector<8x384xf32> to vector<1x32xf32>
    %11 = vector.extract_strided_slice %7 {offsets = [5, 0], sizes = [1, 32], strides = [1, 1]} : vector<8x384xf32> to vector<1x32xf32>
    %12 = vector.extract_strided_slice %7 {offsets = [6, 0], sizes = [1, 32], strides = [1, 1]} : vector<8x384xf32> to vector<1x32xf32>
    %13 = vector.extract_strided_slice %7 {offsets = [7, 0], sizes = [1, 32], strides = [1, 1]} : vector<8x384xf32> to vector<1x32xf32>
    %14 = vector.extract_strided_slice %7 {offsets = [1, 0], sizes = [1, 128], strides = [1, 1]} : vector<8x384xf32> to vector<1x128xf32>
    %cst = arith.constant dense<0.000000e+00> : vector<16xf32>
    %15 = vector.multi_reduction <add>, %0, %cst [1] : vector<16x32xf32> to vector<16xf32>
    %16 = vector.shape_cast %15 : vector<16xf32> to vector<16x1xf32>
    %cst_13 = arith.constant 3.200000e+01 : f32
    %17 = vector.broadcast %cst_13 : f32 to vector<16x1xf32>
    %18 = arith.divf %16, %17 : vector<16x1xf32>
    %19 = vector.broadcast %18 : vector<16x1xf32> to vector<16x32xf32>
    %20 = arith.subf %0, %19 : vector<16x32xf32>
    %21 = vector.broadcast %18 : vector<16x1xf32> to vector<16x32xf32>
    %22 = arith.subf %0, %21 : vector<16x32xf32>
    %23 = arith.mulf %20, %22 : vector<16x32xf32>
    %cst_14 = arith.constant dense<0.000000e+00> : vector<16xf32>
    %24 = vector.multi_reduction <add>, %23, %cst_14 [1] : vector<16x32xf32> to vector<16xf32>
    %25 = vector.shape_cast %24 : vector<16xf32> to vector<16x1xf32>
    %cst_15 = arith.constant 3.200000e+01 : f32
    %26 = vector.broadcast %cst_15 : f32 to vector<16x1xf32>
    %27 = arith.divf %25, %26 : vector<16x1xf32>
    %28 = vector.broadcast %18 : vector<16x1xf32> to vector<16x32xf32>
    %29 = arith.subf %0, %28 : vector<16x32xf32>
    %cst_16 = arith.constant 9.99999974E-6 : f32
    %30 = vector.broadcast %cst_16 : f32 to vector<16x1xf32>
    %31 = arith.addf %27, %30 : vector<16x1xf32>
    %32 = math.rsqrt %31 : vector<16x1xf32>
    %33 = vector.broadcast %32 : vector<16x1xf32> to vector<16x32xf32>
    %34 = arith.mulf %29, %33 : vector<16x32xf32>
    %35 = vector.broadcast %8 : vector<1x32xf32> to vector<16x32xf32>
    %36 = arith.mulf %34, %35 : vector<16x32xf32>
    %37 = vector.broadcast %9 : vector<1x32xf32> to vector<16x32xf32>
    %38 = arith.addf %36, %37 : vector<16x32xf32>
    %39 = vector.extract_strided_slice %5 {offsets = [0, 0], sizes = [32, 384], strides = [1, 1]} : vector<32x640xf32> to vector<32x384xf32>
    %cst_17 = arith.constant dense<0.000000e+00> : vector<16x384xf32>
    %40 = tpu.matmul %38, %39, %cst_17 {dimension_numbers = #tpu.dot_dimension_numbers<[1], [0], [0], [1], [0, 0, 1, 1], [], []>} : vector<16x32xf32>, vector<32x384xf32>, vector<16x384xf32> -> vector<16x384xf32>
    %41 = vector.extract_strided_slice %7 {offsets = [0, 0], sizes = [1, 384], strides = [1, 1]} : vector<8x384xf32> to vector<1x384xf32>
    %42 = vector.broadcast %41 : vector<1x384xf32> to vector<16x384xf32>
    %43 = arith.addf %40, %42 : vector<16x384xf32>
    %44 = vector.extract_strided_slice %43 {offsets = [0, 0], sizes = [16, 32], strides = [1, 1]} : vector<16x384xf32> to vector<16x32xf32>
    %45 = vector.extract_strided_slice %43 {offsets = [0, 128], sizes = [16, 32], strides = [1, 1]} : vector<16x384xf32> to vector<16x32xf32>
    %46 = vector.extract_strided_slice %43 {offsets = [0, 256], sizes = [16, 32], strides = [1, 1]} : vector<16x384xf32> to vector<16x32xf32>
    %47 = tpu.concatenate %45, %45, %45, %45 in 0 : vector<16x32xf32>, vector<16x32xf32>, vector<16x32xf32>, vector<16x32xf32> -> vector<64x32xf32>
    %48 = arith.mulf %47, %2 : vector<64x32xf32>
    %49 = tpu.concatenate %46, %46, %46, %46 in 0 : vector<16x32xf32>, vector<16x32xf32>, vector<16x32xf32>, vector<16x32xf32> -> vector<64x32xf32>
    %50 = arith.mulf %49, %2 : vector<64x32xf32>
    %cst_18 = arith.constant dense<0.000000e+00> : vector<16x64xf32>
    %51 = tpu.matmul %44, %48, %cst_18 {dimension_numbers = #tpu.dot_dimension_numbers<[1], [1], [0], [0], [0, 0, 1, 0], [], []>} : vector<16x32xf32>, vector<64x32xf32>, vector<16x64xf32> -> vector<16x64xf32>
    %52 = arith.addf %51, %1 : vector<16x64xf32>
    %cst_19 = arith.constant dense<0xFF800000> : vector<16xf32>
    %53 = vector.multi_reduction <maximumf>, %52, %cst_19 [1] : vector<16x64xf32> to vector<16xf32>
    %54 = vector.shape_cast %53 : vector<16xf32> to vector<16x1xf32>
    %55 = vector.broadcast %54 : vector<16x1xf32> to vector<16x64xf32>
    %56 = arith.subf %52, %55 : vector<16x64xf32>
    %57 = math.exp %56 : vector<16x64xf32>
    %cst_20 = arith.constant dense<0.000000e+00> : vector<16x64xf32>
    %58 = tpu.matmul %57, %3, %cst_20 {dimension_numbers = #tpu.dot_dimension_numbers<[1], [0], [0], [1], [0, 0, 1, 1], [], []>} : vector<16x64xf32>, vector<64x64xf32>, vector<16x64xf32> -> vector<16x64xf32>
    %59 = tpu.reciprocal %58 : vector<16x64xf32> -> vector<16x64xf32>
    %60 = arith.mulf %57, %59 : vector<16x64xf32>
    %cst_21 = arith.constant dense<0.000000e+00> : vector<16x32xf32>
    %61 = tpu.matmul %60, %50, %cst_21 {dimension_numbers = #tpu.dot_dimension_numbers<[1], [0], [0], [1], [0, 0, 1, 1], [], []>} : vector<16x64xf32>, vector<64x32xf32>, vector<16x32xf32> -> vector<16x32xf32>
    %62 = vector.extract_strided_slice %5 {offsets = [0, 384], sizes = [32, 32], strides = [1, 1]} : vector<32x640xf32> to vector<32x32xf32>
    %cst_22 = arith.constant dense<0.000000e+00> : vector<16x32xf32>
    %63 = tpu.matmul %61, %62, %cst_22 {dimension_numbers = #tpu.dot_dimension_numbers<[1], [0], [0], [1], [0, 0, 1, 1], [], []>} : vector<16x32xf32>, vector<32x32xf32>, vector<16x32xf32> -> vector<16x32xf32>
    %64 = vector.broadcast %12 : vector<1x32xf32> to vector<16x32xf32>
    %65 = arith.addf %63, %64 : vector<16x32xf32>
    %66 = arith.addf %0, %65 : vector<16x32xf32>
    %cst_23 = arith.constant dense<0.000000e+00> : vector<16xf32>
    %67 = vector.multi_reduction <add>, %66, %cst_23 [1] : vector<16x32xf32> to vector<16xf32>
    %68 = vector.shape_cast %67 : vector<16xf32> to vector<16x1xf32>
    %cst_24 = arith.constant 3.200000e+01 : f32
    %69 = vector.broadcast %cst_24 : f32 to vector<16x1xf32>
    %70 = arith.divf %68, %69 : vector<16x1xf32>
    %71 = vector.broadcast %70 : vector<16x1xf32> to vector<16x32xf32>
    %72 = arith.subf %66, %71 : vector<16x32xf32>
    %73 = vector.broadcast %70 : vector<16x1xf32> to vector<16x32xf32>
    %74 = arith.subf %66, %73 : vector<16x32xf32>
    %75 = arith.mulf %72, %74 : vector<16x32xf32>
    %cst_25 = arith.constant dense<0.000000e+00> : vector<16xf32>
    %76 = vector.multi_reduction <add>, %75, %cst_25 [1] : vector<16x32xf32> to vector<16xf32>
    %77 = vector.shape_cast %76 : vector<16xf32> to vector<16x1xf32>
    %cst_26 = arith.constant 3.200000e+01 : f32
    %78 = vector.broadcast %cst_26 : f32 to vector<16x1xf32>
    %79 = arith.divf %77, %78 : vector<16x1xf32>
    %80 = vector.broadcast %70 : vector<16x1xf32> to vector<16x32xf32>
    %81 = arith.subf %66, %80 : vector<16x32xf32>
    %cst_27 = arith.constant 9.99999974E-6 : f32
    %82 = vector.broadcast %cst_27 : f32 to vector<16x1xf32>
    %83 = arith.addf %79, %82 : vector<16x1xf32>
    %84 = math.rsqrt %83 : vector<16x1xf32>
    %85 = vector.broadcast %84 : vector<16x1xf32> to vector<16x32xf32>
    %86 = arith.mulf %81, %85 : vector<16x32xf32>
    %87 = vector.broadcast %10 : vector<1x32xf32> to vector<16x32xf32>
    %88 = arith.mulf %86, %87 : vector<16x32xf32>
    %89 = vector.broadcast %11 : vector<1x32xf32> to vector<16x32xf32>
    %90 = arith.addf %88, %89 : vector<16x32xf32>
    %91 = vector.extract_strided_slice %5 {offsets = [0, 512], sizes = [32, 128], strides = [1, 1]} : vector<32x640xf32> to vector<32x128xf32>
    %cst_28 = arith.constant dense<0.000000e+00> : vector<16x128xf32>
    %92 = tpu.matmul %90, %91, %cst_28 {dimension_numbers = #tpu.dot_dimension_numbers<[1], [0], [0], [1], [0, 0, 1, 1], [], []>} : vector<16x32xf32>, vector<32x128xf32>, vector<16x128xf32> -> vector<16x128xf32>
    %93 = vector.broadcast %14 : vector<1x128xf32> to vector<16x128xf32>
    %94 = arith.addf %92, %93 : vector<16x128xf32>
    %cst_29 = arith.constant 0.000000e+00 : f32
    %95 = vector.broadcast %cst_29 : f32 to vector<16x128xf32>
    %96 = arith.maximumf %94, %95 : vector<16x128xf32>
    %c0_30 = arith.constant 0 : index
    %c0_31 = arith.constant 0 : index
    %c0_32 = arith.constant 0 : index
    %97 = vector.load %arg6[%c0_30, %c0_31, %c0_32] : memref<2x128x32xf32, #tpu.memory_space<vmem>>, vector<1x128x32xf32>
    %98 = vector.shape_cast %97 : vector<1x128x32xf32> to vector<128x32xf32>
    %cst_33 = arith.constant dense<0.000000e+00> : vector<16x32xf32>
    %99 = tpu.matmul %96, %98, %cst_33 {dimension_numbers = #tpu.dot_dimension_numbers<[1], [0], [0], [1], [0, 0, 1, 1], [], []>} : vector<16x128xf32>, vector<128x32xf32>, vector<16x32xf32> -> vector<16x32xf32>
    %100 = vector.broadcast %13 : vector<1x32xf32> to vector<16x32xf32>
    %101 = arith.addf %99, %100 : vector<16x32xf32>
    %102 = arith.addf %66, %101 : vector<16x32xf32>
    %c1 = arith.constant 1 : index
    %c0_34 = arith.constant 0 : index
    %c0_35 = arith.constant 0 : index
    %103 = vector.load %arg5[%c1, %c0_34, %c0_35] : memref<2x32x640xf32, #tpu.memory_space<vmem>>, vector<1x32x640xf32>
    %104 = vector.shape_cast %103 : vector<1x32x640xf32> to vector<32x640xf32>
    %c1_36 = arith.constant 1 : index
    %c0_37 = arith.constant 0 : index
    %c0_38 = arith.constant 0 : index
    %105 = vector.load %arg7[%c1_36, %c0_37, %c0_38] : memref<2x8x384xf32, #tpu.memory_space<vmem>>, vector<1x8x384xf32>
    %106 = vector.shape_cast %105 : vector<1x8x384xf32> to vector<8x384xf32>
    %107 = vector.extract_strided_slice %106 {offsets = [2, 0], sizes = [1, 32], strides = [1, 1]} : vector<8x384xf32> to vector<1x32xf32>
    %108 = vector.extract_strided_slice %106 {offsets = [3, 0], sizes = [1, 32], strides = [1, 1]} : vector<8x384xf32> to vector<1x32xf32>
    %109 = vector.extract_strided_slice %106 {offsets = [4, 0], sizes = [1, 32], strides = [1, 1]} : vector<8x384xf32> to vector<1x32xf32>
    %110 = vector.extract_strided_slice %106 {offsets = [5, 0], sizes = [1, 32], strides = [1, 1]} : vector<8x384xf32> to vector<1x32xf32>
    %111 = vector.extract_strided_slice %106 {offsets = [6, 0], sizes = [1, 32], strides = [1, 1]} : vector<8x384xf32> to vector<1x32xf32>
    %112 = vector.extract_strided_slice %106 {offsets = [7, 0], sizes = [1, 32], strides = [1, 1]} : vector<8x384xf32> to vector<1x32xf32>
    %113 = vector.extract_strided_slice %106 {offsets = [1, 0], sizes = [1, 128], strides = [1, 1]} : vector<8x384xf32> to vector<1x128xf32>
    %cst_39 = arith.constant dense<0.000000e+00> : vector<16xf32>
    %114 = vector.multi_reduction <add>, %102, %cst_39 [1] : vector<16x32xf32> to vector<16xf32>
    %115 = vector.shape_cast %114 : vector<16xf32> to vector<16x1xf32>
    %cst_40 = arith.constant 3.200000e+01 : f32
    %116 = vector.broadcast %cst_40 : f32 to vector<16x1xf32>
    %117 = arith.divf %115, %116 : vector<16x1xf32>
    %118 = vector.broadcast %117 : vector<16x1xf32> to vector<16x32xf32>
    %119 = arith.subf %102, %118 : vector<16x32xf32>
    %120 = vector.broadcast %117 : vector<16x1xf32> to vector<16x32xf32>
    %121 = arith.subf %102, %120 : vector<16x32xf32>
    %122 = arith.mulf %119, %121 : vector<16x32xf32>
    %cst_41 = arith.constant dense<0.000000e+00> : vector<16xf32>
    %123 = vector.multi_reduction <add>, %122, %cst_41 [1] : vector<16x32xf32> to vector<16xf32>
    %124 = vector.shape_cast %123 : vector<16xf32> to vector<16x1xf32>
    %cst_42 = arith.constant 3.200000e+01 : f32
    %125 = vector.broadcast %cst_42 : f32 to vector<16x1xf32>
    %126 = arith.divf %124, %125 : vector<16x1xf32>
    %127 = vector.broadcast %117 : vector<16x1xf32> to vector<16x32xf32>
    %128 = arith.subf %102, %127 : vector<16x32xf32>
    %cst_43 = arith.constant 9.99999974E-6 : f32
    %129 = vector.broadcast %cst_43 : f32 to vector<16x1xf32>
    %130 = arith.addf %126, %129 : vector<16x1xf32>
    %131 = math.rsqrt %130 : vector<16x1xf32>
    %132 = vector.broadcast %131 : vector<16x1xf32> to vector<16x32xf32>
    %133 = arith.mulf %128, %132 : vector<16x32xf32>
    %134 = vector.broadcast %107 : vector<1x32xf32> to vector<16x32xf32>
    %135 = arith.mulf %133, %134 : vector<16x32xf32>
    %136 = vector.broadcast %108 : vector<1x32xf32> to vector<16x32xf32>
    %137 = arith.addf %135, %136 : vector<16x32xf32>
    %138 = vector.extract_strided_slice %104 {offsets = [0, 0], sizes = [32, 384], strides = [1, 1]} : vector<32x640xf32> to vector<32x384xf32>
    %cst_44 = arith.constant dense<0.000000e+00> : vector<16x384xf32>
    %139 = tpu.matmul %137, %138, %cst_44 {dimension_numbers = #tpu.dot_dimension_numbers<[1], [0], [0], [1], [0, 0, 1, 1], [], []>} : vector<16x32xf32>, vector<32x384xf32>, vector<16x384xf32> -> vector<16x384xf32>
    %140 = vector.extract_strided_slice %106 {offsets = [0, 0], sizes = [1, 384], strides = [1, 1]} : vector<8x384xf32> to vector<1x384xf32>
    %141 = vector.broadcast %140 : vector<1x384xf32> to vector<16x384xf32>
    %142 = arith.addf %139, %141 : vector<16x384xf32>
    %143 = vector.extract_strided_slice %142 {offsets = [0, 0], sizes = [16, 32], strides = [1, 1]} : vector<16x384xf32> to vector<16x32xf32>
    %144 = vector.extract_strided_slice %142 {offsets = [0, 128], sizes = [16, 32], strides = [1, 1]} : vector<16x384xf32> to vector<16x32xf32>
    %145 = vector.extract_strided_slice %142 {offsets = [0, 256], sizes = [16, 32], strides = [1, 1]} : vector<16x384xf32> to vector<16x32xf32>
    %146 = tpu.concatenate %144, %144, %144, %144 in 0 : vector<16x32xf32>, vector<16x32xf32>, vector<16x32xf32>, vector<16x32xf32> -> vector<64x32xf32>
    %147 = arith.mulf %146, %2 : vector<64x32xf32>
    %148 = tpu.concatenate %145, %145, %145, %145 in 0 : vector<16x32xf32>, vector<16x32xf32>, vector<16x32xf32>, vector<16x32xf32> -> vector<64x32xf32>
    %149 = arith.mulf %148, %2 : vector<64x32xf32>
    %cst_45 = arith.constant dense<0.000000e+00> : vector<16x64xf32>
    %150 = tpu.matmul %143, %147, %cst_45 {dimension_numbers = #tpu.dot_dimension_numbers<[1], [1], [0], [0], [0, 0, 1, 0], [], []>} : vector<16x32xf32>, vector<64x32xf32>, vector<16x64xf32> -> vector<16x64xf32>
    %151 = arith.addf %150, %1 : vector<16x64xf32>
    %cst_46 = arith.constant dense<0xFF800000> : vector<16xf32>
    %152 = vector.multi_reduction <maximumf>, %151, %cst_46 [1] : vector<16x64xf32> to vector<16xf32>
    %153 = vector.shape_cast %152 : vector<16xf32> to vector<16x1xf32>
    %154 = vector.broadcast %153 : vector<16x1xf32> to vector<16x64xf32>
    %155 = arith.subf %151, %154 : vector<16x64xf32>
    %156 = math.exp %155 : vector<16x64xf32>
    %cst_47 = arith.constant dense<0.000000e+00> : vector<16x64xf32>
    %157 = tpu.matmul %156, %3, %cst_47 {dimension_numbers = #tpu.dot_dimension_numbers<[1], [0], [0], [1], [0, 0, 1, 1], [], []>} : vector<16x64xf32>, vector<64x64xf32>, vector<16x64xf32> -> vector<16x64xf32>
    %158 = tpu.reciprocal %157 : vector<16x64xf32> -> vector<16x64xf32>
    %159 = arith.mulf %156, %158 : vector<16x64xf32>
    %cst_48 = arith.constant dense<0.000000e+00> : vector<16x32xf32>
    %160 = tpu.matmul %159, %149, %cst_48 {dimension_numbers = #tpu.dot_dimension_numbers<[1], [0], [0], [1], [0, 0, 1, 1], [], []>} : vector<16x64xf32>, vector<64x32xf32>, vector<16x32xf32> -> vector<16x32xf32>
    %161 = vector.extract_strided_slice %104 {offsets = [0, 384], sizes = [32, 32], strides = [1, 1]} : vector<32x640xf32> to vector<32x32xf32>
    %cst_49 = arith.constant dense<0.000000e+00> : vector<16x32xf32>
    %162 = tpu.matmul %160, %161, %cst_49 {dimension_numbers = #tpu.dot_dimension_numbers<[1], [0], [0], [1], [0, 0, 1, 1], [], []>} : vector<16x32xf32>, vector<32x32xf32>, vector<16x32xf32> -> vector<16x32xf32>
    %163 = vector.broadcast %111 : vector<1x32xf32> to vector<16x32xf32>
    %164 = arith.addf %162, %163 : vector<16x32xf32>
    %165 = arith.addf %102, %164 : vector<16x32xf32>
    %cst_50 = arith.constant dense<0.000000e+00> : vector<16xf32>
    %166 = vector.multi_reduction <add>, %165, %cst_50 [1] : vector<16x32xf32> to vector<16xf32>
    %167 = vector.shape_cast %166 : vector<16xf32> to vector<16x1xf32>
    %cst_51 = arith.constant 3.200000e+01 : f32
    %168 = vector.broadcast %cst_51 : f32 to vector<16x1xf32>
    %169 = arith.divf %167, %168 : vector<16x1xf32>
    %170 = vector.broadcast %169 : vector<16x1xf32> to vector<16x32xf32>
    %171 = arith.subf %165, %170 : vector<16x32xf32>
    %172 = vector.broadcast %169 : vector<16x1xf32> to vector<16x32xf32>
    %173 = arith.subf %165, %172 : vector<16x32xf32>
    %174 = arith.mulf %171, %173 : vector<16x32xf32>
    %cst_52 = arith.constant dense<0.000000e+00> : vector<16xf32>
    %175 = vector.multi_reduction <add>, %174, %cst_52 [1] : vector<16x32xf32> to vector<16xf32>
    %176 = vector.shape_cast %175 : vector<16xf32> to vector<16x1xf32>
    %cst_53 = arith.constant 3.200000e+01 : f32
    %177 = vector.broadcast %cst_53 : f32 to vector<16x1xf32>
    %178 = arith.divf %176, %177 : vector<16x1xf32>
    %179 = vector.broadcast %169 : vector<16x1xf32> to vector<16x32xf32>
    %180 = arith.subf %165, %179 : vector<16x32xf32>
    %cst_54 = arith.constant 9.99999974E-6 : f32
    %181 = vector.broadcast %cst_54 : f32 to vector<16x1xf32>
    %182 = arith.addf %178, %181 : vector<16x1xf32>
    %183 = math.rsqrt %182 : vector<16x1xf32>
    %184 = vector.broadcast %183 : vector<16x1xf32> to vector<16x32xf32>
    %185 = arith.mulf %180, %184 : vector<16x32xf32>
    %186 = vector.broadcast %109 : vector<1x32xf32> to vector<16x32xf32>
    %187 = arith.mulf %185, %186 : vector<16x32xf32>
    %188 = vector.broadcast %110 : vector<1x32xf32> to vector<16x32xf32>
    %189 = arith.addf %187, %188 : vector<16x32xf32>
    %190 = vector.extract_strided_slice %104 {offsets = [0, 512], sizes = [32, 128], strides = [1, 1]} : vector<32x640xf32> to vector<32x128xf32>
    %cst_55 = arith.constant dense<0.000000e+00> : vector<16x128xf32>
    %191 = tpu.matmul %189, %190, %cst_55 {dimension_numbers = #tpu.dot_dimension_numbers<[1], [0], [0], [1], [0, 0, 1, 1], [], []>} : vector<16x32xf32>, vector<32x128xf32>, vector<16x128xf32> -> vector<16x128xf32>
    %192 = vector.broadcast %113 : vector<1x128xf32> to vector<16x128xf32>
    %193 = arith.addf %191, %192 : vector<16x128xf32>
    %cst_56 = arith.constant 0.000000e+00 : f32
    %194 = vector.broadcast %cst_56 : f32 to vector<16x128xf32>
    %195 = arith.maximumf %193, %194 : vector<16x128xf32>
    %c1_57 = arith.constant 1 : index
    %c0_58 = arith.constant 0 : index
    %c0_59 = arith.constant 0 : index
    %196 = vector.load %arg6[%c1_57, %c0_58, %c0_59] : memref<2x128x32xf32, #tpu.memory_space<vmem>>, vector<1x128x32xf32>
    %197 = vector.shape_cast %196 : vector<1x128x32xf32> to vector<128x32xf32>
    %cst_60 = arith.constant dense<0.000000e+00> : vector<16x32xf32>
    %198 = tpu.matmul %195, %197, %cst_60 {dimension_numbers = #tpu.dot_dimension_numbers<[1], [0], [0], [1], [0, 0, 1, 1], [], []>} : vector<16x128xf32>, vector<128x32xf32>, vector<16x32xf32> -> vector<16x32xf32>
    %199 = vector.broadcast %112 : vector<1x32xf32> to vector<16x32xf32>
    %200 = arith.addf %198, %199 : vector<16x32xf32>
    %201 = arith.addf %165, %200 : vector<16x32xf32>
    %c0_61 = arith.constant 0 : index
    %c0_62 = arith.constant 0 : index
    %202 = vector.load %arg9[%c0_61, %c0_62] : memref<3x128xf32, #tpu.memory_space<vmem>>, vector<1x32xf32>
    %c1_63 = arith.constant 1 : index
    %c0_64 = arith.constant 0 : index
    %203 = vector.load %arg9[%c1_63, %c0_64] : memref<3x128xf32, #tpu.memory_space<vmem>>, vector<1x32xf32>
    %cst_65 = arith.constant dense<0.000000e+00> : vector<16xf32>
    %204 = vector.multi_reduction <add>, %201, %cst_65 [1] : vector<16x32xf32> to vector<16xf32>
    %205 = vector.shape_cast %204 : vector<16xf32> to vector<16x1xf32>
    %cst_66 = arith.constant 3.200000e+01 : f32
    %206 = vector.broadcast %cst_66 : f32 to vector<16x1xf32>
    %207 = arith.divf %205, %206 : vector<16x1xf32>
    %208 = vector.broadcast %207 : vector<16x1xf32> to vector<16x32xf32>
    %209 = arith.subf %201, %208 : vector<16x32xf32>
    %210 = vector.broadcast %207 : vector<16x1xf32> to vector<16x32xf32>
    %211 = arith.subf %201, %210 : vector<16x32xf32>
    %212 = arith.mulf %209, %211 : vector<16x32xf32>
    %cst_67 = arith.constant dense<0.000000e+00> : vector<16xf32>
    %213 = vector.multi_reduction <add>, %212, %cst_67 [1] : vector<16x32xf32> to vector<16xf32>
    %214 = vector.shape_cast %213 : vector<16xf32> to vector<16x1xf32>
    %cst_68 = arith.constant 3.200000e+01 : f32
    %215 = vector.broadcast %cst_68 : f32 to vector<16x1xf32>
    %216 = arith.divf %214, %215 : vector<16x1xf32>
    %217 = vector.broadcast %207 : vector<16x1xf32> to vector<16x32xf32>
    %218 = arith.subf %201, %217 : vector<16x32xf32>
    %cst_69 = arith.constant 9.99999974E-6 : f32
    %219 = vector.broadcast %cst_69 : f32 to vector<16x1xf32>
    %220 = arith.addf %216, %219 : vector<16x1xf32>
    %221 = math.rsqrt %220 : vector<16x1xf32>
    %222 = vector.broadcast %221 : vector<16x1xf32> to vector<16x32xf32>
    %223 = arith.mulf %218, %222 : vector<16x32xf32>
    %224 = vector.broadcast %202 : vector<1x32xf32> to vector<16x32xf32>
    %225 = arith.mulf %223, %224 : vector<16x32xf32>
    %226 = vector.broadcast %203 : vector<1x32xf32> to vector<16x32xf32>
    %227 = arith.addf %225, %226 : vector<16x32xf32>
    %c0_70 = arith.constant 0 : index
    %c0_71 = arith.constant 0 : index
    %228 = vector.load %arg8[%c0_70, %c0_71] : memref<32x128xf32, #tpu.memory_space<vmem>>, vector<32x128xf32>
    %cst_72 = arith.constant dense<0.000000e+00> : vector<16x128xf32>
    %229 = tpu.matmul %227, %228, %cst_72 {dimension_numbers = #tpu.dot_dimension_numbers<[1], [0], [0], [1], [0, 0, 1, 1], [], []>} : vector<16x32xf32>, vector<32x128xf32>, vector<16x128xf32> -> vector<16x128xf32>
    %c2 = arith.constant 2 : index
    %c0_73 = arith.constant 0 : index
    %230 = vector.load %arg9[%c2, %c0_73] : memref<3x128xf32, #tpu.memory_space<vmem>>, vector<1x128xf32>
    %231 = vector.broadcast %230 : vector<1x128xf32> to vector<16x128xf32>
    %232 = arith.addf %229, %231 : vector<16x128xf32>
    %c0_74 = arith.constant 0 : index
    %c0_75 = arith.constant 0 : index
    %233 = vector.load %arg10[%c0_74, %c0_75] : memref<16x128xf32, #tpu.memory_space<vmem>>, vector<16x128xf32>
    tpu.vector_store %arg10[%c0_74, %c0_75], %232 {strides = array<i32>} : memref<16x128xf32, #tpu.memory_space<vmem>>, vector<16x128xf32>,
    return
  }
  func.func @transform_0(%arg0: i32) -> (i32, i32) {
    %c0_i32 = arith.constant 0 : i32
    %c0_i32_0 = arith.constant 0 : i32
    return %arg0, %c0_i32 : i32, i32
  }
  func.func @transform_1(%arg0: i32) -> (i32, i32) {
    %c0_i32 = arith.constant 0 : i32
    %c0_i32_0 = arith.constant 0 : i32
    %c0_i32_1 = arith.constant 0 : i32
    return %c0_i32, %c0_i32_0 : i32, i32
  }
  func.func @transform_2(%arg0: i32) -> (i32, i32) {
    %c0_i32 = arith.constant 0 : i32
    %c0_i32_0 = arith.constant 0 : i32
    %c0_i32_1 = arith.constant 0 : i32
    return %c0_i32, %c0_i32_0 : i32, i32
  }
  func.func @transform_3(%arg0: i32) -> (i32, i32) {
    %c0_i32 = arith.constant 0 : i32
    %c0_i32_0 = arith.constant 0 : i32
    %c0_i32_1 = arith.constant 0 : i32
    return %c0_i32, %c0_i32_0 : i32, i32
  }
  func.func @transform_4(%arg0: i32) -> (i32, i32, i32) {
    %c0_i32 = arith.constant 0 : i32
    %c0_i32_0 = arith.constant 0 : i32
    %c0_i32_1 = arith.constant 0 : i32
    %c0_i32_2 = arith.constant 0 : i32
    return %c0_i32, %c0_i32_0, %c0_i32_1 : i32, i32, i32
  }
  func.func @transform_5(%arg0: i32) -> (i32, i32, i32) {
    %c0_i32 = arith.constant 0 : i32
    %c0_i32_0 = arith.constant 0 : i32
    %c0_i32_1 = arith.constant 0 : i32
    %c0_i32_2 = arith.constant 0 : i32
    return %c0_i32, %c0_i32_0, %c0_i32_1 : i32, i32, i32
  }
  func.func @transform_6(%arg0: i32) -> (i32, i32, i32) {
    %c0_i32 = arith.constant 0 : i32
    %c0_i32_0 = arith.constant 0 : i32
    %c0_i32_1 = arith.constant 0 : i32
    %c0_i32_2 = arith.constant 0 : i32
    return %c0_i32, %c0_i32_0, %c0_i32_1 : i32, i32, i32
  }
  func.func @transform_7(%arg0: i32) -> (i32, i32) {
    %c0_i32 = arith.constant 0 : i32
    %c0_i32_0 = arith.constant 0 : i32
    %c0_i32_1 = arith.constant 0 : i32
    return %c0_i32, %c0_i32_0 : i32, i32
  }
  func.func @transform_8(%arg0: i32) -> (i32, i32) {
    %c0_i32 = arith.constant 0 : i32
    %c0_i32_0 = arith.constant 0 : i32
    %c0_i32_1 = arith.constant 0 : i32
    return %c0_i32, %c0_i32_0 : i32, i32
  }
  func.func @transform_9(%arg0: i32) -> (i32, i32) {
    %c0_i32 = arith.constant 0 : i32
    %c0_i32_0 = arith.constant 0 : i32
    return %arg0, %c0_i32 : i32, i32
  }
}

</mosaic_0001>

<llo_original>
// kernel: tpu_custom_call.1
$region0: #{tpu_custom_call.1}
  #allocation0 [shape = 'u32[]', space=smem, size = 0x4, offset = 0x4, fixed_abs, tag = 'smem constant byte address 0x4 - core index']
  #allocation1 [shape = 'u32[144,128]{1,0:T(1,128)}', space=vmem, size = 0x12000, scoped, tag = 'internal scratch']
  %s0 = inlined_call_operand.hbm [shape: f32[16,32], index: 0, kind: input, shape index: {}]
  %s1 = inlined_call_operand.hbm [shape: f32[16,64], index: 1, kind: input, shape index: {}]
  %s2 = inlined_call_operand.vmem [shape: f32[64,32], index: 2, kind: input, shape index: {}]
  %s3 = inlined_call_operand.hbm [shape: f32[64,64], index: 3, kind: input, shape index: {}]
  %s4 = inlined_call_operand.vmem [shape: f32[2,32,640], index: 4, kind: input, shape index: {}]
  %s5 = inlined_call_operand.vmem [shape: f32[2,128,32], index: 5, kind: input, shape index: {}]
  %s6 = inlined_call_operand.hbm [shape: f32[2,8,384], index: 6, kind: input, shape index: {}]
  %s7 = inlined_call_operand.vmem [shape: f32[32,128], index: 7, kind: input, shape index: {}]
  %s8 = inlined_call_operand.vmem [shape: f32[3,128], index: 8, kind: input, shape index: {}]
  %s9 = inlined_call_operand.hbm [shape: f32[16,128], index: 9, kind: output, shape index: {}]
  %s10 = sld [smem:[#allocation0]]
  $region62: #{tpu_custom_call.1} parent=0
    _
  %s12 = ssub.s32 1, %s10
  %s13 = scalar_select 0, %s12, %s10
  $region1: #{tpu_custom_call.1} parent=0
    #allocation2 [shape = 'u8[8192]{0}', space=vmem, size = 0x2000, scoped, tag = 'input window, operand 0, single buffered']
    #allocation3 [shape = 's32[1]{0}', space=sflag, size = 0x4, scoped, tag = 'scoped memory for tpu_custom_call.1']
    #allocation4 [shape = 's32[1]{0}', space=sflag, size = 0x4, scoped, tag = 'scoped memory for tpu_custom_call.1']
    #allocation5 [shape = 'u8[8192]{0}', space=vmem, size = 0x2000, scoped, tag = 'input window, operand 1, single buffered']
    #allocation6 [shape = 's32[1]{0}', space=sflag, size = 0x4, scoped, tag = 'scoped memory for tpu_custom_call.1']
    #allocation7 [shape = 'u8[32768]{0}', space=vmem, size = 0x8000, scoped, tag = 'input window, operand 3, single buffered']
    #allocation8 [shape = 'u8[24576]{0}', space=vmem, size = 0x6000, scoped, tag = 'input window, operand 6, single buffered']
    #allocation9 [shape = 's32[1]{0}', space=sflag, size = 0x4, scoped, tag = 'scoped memory for tpu_custom_call.1']
    #allocation10 [shape = 'u8[8192]{0}', space=vmem, size = 0x2000, scoped, tag = 'output window, operand 0, single buffered']
    %14 = vsyncpa [#allocation3], 0
    %15 = vsyncpa [#allocation6], 0
    %16 = vsyncpa [#allocation9], 0
    %17 = vsyncpa [#allocation4], 0
    // Predicated region
    $region2: #{tpu_custom_call.1} parent=1 // pred_check
      _
    $region3: #{tpu_custom_call.1} parent=1 // pred_check_branch
      %19 = sbr.rel (0) target = $region5
    $region4: #{tpu_custom_call.1} parent=1 // pred_region
      %s21 = ssub.s32 256, 256
      %22 = vsyncadd [#allocation3], %s21
      %s23 = sshll.u32 [#allocation2], 4
      %s24 = int_to_ptr.vmem [resolvable:$true] %s23
      %29 = dma.hbm_to_vmem [thread:$0]  %s0, 256, %s24, [#allocation3], 128, 128, 8
    $region5: #{tpu_custom_call.1} parent=1 // pred_fallthru
      _
    // Predicated region
    $region6: #{tpu_custom_call.1} parent=1 // pred_check
      _
    $region7: #{tpu_custom_call.1} parent=1 // pred_check_branch
      %31 = sbr.rel (0) target = $region9
    $region8: #{tpu_custom_call.1} parent=1 // pred_region
      %s33 = ssub.s32 256, 256
      %34 = vsyncadd [#allocation6], %s33
      %s35 = sshll.u32 [#allocation5], 4
      %s36 = int_to_ptr.vmem [resolvable:$true] %s35
      %41 = dma.hbm_to_vmem [thread:$0]  %s1, 256, %s36, [#allocation6], 128, 128, 8
    $region9: #{tpu_custom_call.1} parent=1 // pred_fallthru
      _
    // Predicated region
    $region10: #{tpu_custom_call.1} parent=1 // pred_check
      _
    $region11: #{tpu_custom_call.1} parent=1 // pred_check_branch
      %43 = sbr.rel (0) target = $region13
    $region12: #{tpu_custom_call.1} parent=1 // pred_region
      _
    $region13: #{tpu_custom_call.1} parent=1 // pred_fallthru
      _
    // Predicated region
    $region14: #{tpu_custom_call.1} parent=1 // pred_check
      _
    $region15: #{tpu_custom_call.1} parent=1 // pred_check_branch
      %45 = sbr.rel (0) target = $region17
    $region16: #{tpu_custom_call.1} parent=1 // pred_region
      %s47 = ssub.s32 1024, 1024
      %48 = vsyncadd [#allocation6], %s47
      %s49 = sshll.u32 [#allocation7], 4
      %s50 = int_to_ptr.vmem [resolvable:$true] %s49
      %55 = dma.hbm_to_vmem [thread:$0]  %s3, 1024, %s50, [#allocation6], 128, 128, 8
    $region17: #{tpu_custom_call.1} parent=1 // pred_fallthru
      _
    // Predicated region
    $region18: #{tpu_custom_call.1} parent=1 // pred_check
      _
    $region19: #{tpu_custom_call.1} parent=1 // pred_check_branch
      %57 = sbr.rel (0) target = $region21
    $region20: #{tpu_custom_call.1} parent=1 // pred_region
      _
    $region21: #{tpu_custom_call.1} parent=1 // pred_fallthru
      _
    // Predicated region
    $region22: #{tpu_custom_call.1} parent=1 // pred_check
      _
    $region23: #{tpu_custom_call.1} parent=1 // pred_check_branch
      %59 = sbr.rel (0) target = $region25
    $region24: #{tpu_custom_call.1} parent=1 // pred_region
      _
    $region25: #{tpu_custom_call.1} parent=1 // pred_fallthru
      _
    // Predicated region
    $region26: #{tpu_custom_call.1} parent=1 // pred_check
      _
    $region27: #{tpu_custom_call.1} parent=1 // pred_check_branch
      %61 = sbr.rel (0) target = $region29
    $region28: #{tpu_custom_call.1} parent=1 // pred_region
      %s63 = ssub.s32 768, 768
      %64 = vsyncadd [#allocation9], %s63
      %s65 = sshll.u32 [#allocation8], 4
      %s66 = int_to_ptr.vmem [resolvable:$true] %s65
      %71 = dma.hbm_to_vmem [thread:$0]  %s6, 768, %s66, [#allocation9], 384, 384, 24
    $region29: #{tpu_custom_call.1} parent=1 // pred_fallthru
      _
    // Predicated region
    $region30: #{tpu_custom_call.1} parent=1 // pred_check
      _
    $region31: #{tpu_custom_call.1} parent=1 // pred_check_branch
      %73 = sbr.rel (0) target = $region33
    $region32: #{tpu_custom_call.1} parent=1 // pred_region
      _
    $region33: #{tpu_custom_call.1} parent=1 // pred_fallthru
      _
    // Predicated region
    $region34: #{tpu_custom_call.1} parent=1 // pred_check
      _
    $region35: #{tpu_custom_call.1} parent=1 // pred_check_branch
      %75 = sbr.rel (0) target = $region37
    $region36: #{tpu_custom_call.1} parent=1 // pred_region
      _
    $region37: #{tpu_custom_call.1} parent=1 // pred_fallthru
      _
    // Predicated region
    $region38: #{tpu_custom_call.1} parent=1 // pred_check
      _
    $region39: #{tpu_custom_call.1} parent=1 // pred_check_branch
      %77 = sbr.rel (0) target = $region41
    $region40: #{tpu_custom_call.1} parent=1 // pred_region
      %78 = dma.done [#allocation3], 256
    $region41: #{tpu_custom_call.1} parent=1 // pred_fallthru
      _
    // Predicated region
    $region42: #{tpu_custom_call.1} parent=1 // pred_check
      _
    $region43: #{tpu_custom_call.1} parent=1 // pred_check_branch
      %80 = sbr.rel (0) target = $region45
    $region44: #{tpu_custom_call.1} parent=1 // pred_region
      %81 = dma.done [#allocation6], 256
    $region45: #{tpu_custom_call.1} parent=1 // pred_fallthru
      _
    // Predicated region
    $region46: #{tpu_custom_call.1} parent=1 // pred_check
      _
    $region47: #{tpu_custom_call.1} parent=1 // pred_check_branch
      %83 = sbr.rel (0) target = $region49
    $region48: #{tpu_custom_call.1} parent=1 // pred_region
      %84 = dma.done [#allocation6], 1024
    $region49: #{tpu_custom_call.1} parent=1 // pred_fallthru
      _
    // Predicated region
    $region50: #{tpu_custom_call.1} parent=1 // pred_check
      _
    $region51: #{tpu_custom_call.1} parent=1 // pred_check_branch
      %86 = sbr.rel (0) target = $region53
    $region52: #{tpu_custom_call.1} parent=1 // pred_region
      %87 = dma.done [#allocation9], 768
    $region53: #{tpu_custom_call.1} parent=1 // pred_fallthru
      _
    %v88 = vld [vmem:[#allocation2] sm:$0xff]
    %v89 = vld [vmem:[#allocation2 + $0x8] sm:$0xff]
    %v90 = vld [vmem:[#allocation5] sm:$0xff]
    %v91 = vld [vmem:[#allocation5 + $0x8] sm:$0xff]
    %v92 = vld [vmem:[%s2] sm:$0xff]
    %v93 = vld [vmem:[%s2 + $0x8] sm:$0xff]
    %v94 = vld [vmem:[%s2 + $0x10] sm:$0xff]
    %v95 = vld [vmem:[%s2 + $0x18] sm:$0xff]
    %v96 = vld [vmem:[%s2 + $0x20] sm:$0xff]
    %v97 = vld [vmem:[%s2 + $0x28] sm:$0xff]
    %v98 = vld [vmem:[%s2 + $0x30] sm:$0xff]
    %v99 = vld [vmem:[%s2 + $0x38] sm:$0xff]
    %v100 = vld [vmem:[#allocation7] sm:$0xff]
    %v101 = vld [vmem:[#allocation7 + $0x8] sm:$0xff]
    %v102 = vld [vmem:[#allocation7 + $0x10] sm:$0xff]
    %v103 = vld [vmem:[#allocation7 + $0x18] sm:$0xff]
    %v104 = vld [vmem:[#allocation7 + $0x20] sm:$0xff]
    %v105 = vld [vmem:[#allocation7 + $0x28] sm:$0xff]
    %v106 = vld [vmem:[#allocation7 + $0x30] sm:$0xff]
    %v107 = vld [vmem:[#allocation7 + $0x38] sm:$0xff]
    %v108 = vld [vmem:[%s4] sm:$0xff]
    %v109 = vld [vmem:[%s4 + $0x8] sm:$0xff]
    %v110 = vld [vmem:[%s4 + $0x10] sm:$0xff]
    %v111 = vld [vmem:[%s4 + $0x18] sm:$0xff]
    %v112 = vld [vmem:[%s4 + $0x20] sm:$0xff]
    %v113 = vld [vmem:[%s4 + $0x28] sm:$0xff]
    %v114 = vld [vmem:[%s4 + $0x30] sm:$0xff]
    %v115 = vld [vmem:[%s4 + $0x38] sm:$0xff]
    %v116 = vld [vmem:[%s4 + $0x40] sm:$0xff]
    %v117 = vld [vmem:[%s4 + $0x48] sm:$0xff]
    %v118 = vld [vmem:[%s4 + $0x50] sm:$0xff]
    %v119 = vld [vmem:[%s4 + $0x58] sm:$0xff]
    %v120 = vld [vmem:[%s4 + $0x60] sm:$0xff]
    %v121 = vld [vmem:[%s4 + $0x68] sm:$0xff]
    %v122 = vld [vmem:[%s4 + $0x70] sm:$0xff]
    %v123 = vld [vmem:[%s4 + $0x78] sm:$0xff]
    %v124 = vld [vmem:[%s4 + $0x80] sm:$0xff]
    %v125 = vld [vmem:[%s4 + $0x88] sm:$0xff]
    %v126 = vld [vmem:[%s4 + $0x90] sm:$0xff]
    %v127 = vld [vmem:[%s4 + $0x98] sm:$0xff]
    %v128 = vld [vmem:[#allocation8] sm:$0xff]
    %v129 = vld [vmem:[#allocation8 + $0x8] sm:$0xff]
    %v130 = vld [vmem:[#allocation8 + $0x10] sm:$0xff]
    %vm131 = vcmask 261120
    %v132 = vsel %vm131, %v88, 0.0
    %133 = vadd.xlane.f32.xlu0 %v132
    %v134 = vpop.xlane.xlu0 %133
    %v135 = vsel %vm131, %v89, 0.0
    %136 = vadd.xlane.f32.xlu0 %v135
    %v137 = vpop.xlane.xlu0 %136
    %v138 = vrcp.pop 32.0
    %v139 = vmul.f32 %v134, %v138
    %v140 = vmul.f32 %v137, %v138
    %v141 = vsub.f32 %v88, %v139
    %v142 = vsub.f32 %v89, %v140
    %v143 = vmul.f32 %v141, %v141
    %v144 = vmul.f32 %v142, %v142
    %v145 = vsel %vm131, %v143, 0.0
    %146 = vadd.xlane.f32.xlu0 %v145
    %v147 = vpop.xlane.xlu0 %146
    %v148 = vsel %vm131, %v144, 0.0
    %149 = vadd.xlane.f32.xlu0 %v148
    %v150 = vpop.xlane.xlu0 %149
    %v151 = vmul.f32 %v147, %v138
    %v152 = vmul.f32 %v150, %v138
    %v153 = vadd.f32 %v151, 1e-05
    %v154 = vadd.f32 %v152, 1e-05
    %v155 = vrsqrt.pop %v153
    %v156 = vrsqrt.pop %v154
    %v157 = vmul.f32 %v141, %v155
    %v158 = vmul.f32 %v142, %v156
    %v159 = vlaneseq
    %v160 = vshrl.u32 %v159, 7
    %v161 = vsub.s32 2, %v160
    %v162 = vrot.slane %v128, %v161
    %v163 = vmul.f32 %v157, %v162
    %v164 = vmul.f32 %v158, %v162
    %v165 = vlaneseq
    %v166 = vshrl.u32 %v165, 7
    %v167 = vsub.s32 3, %v166
    %v168 = vrot.slane %v128, %v167
    %v169 = vadd.f32 %v163, %v168
    %v170 = vadd.f32 %v164, %v168
    %v171 = vlaneseq
    %v172 = vshrl.u32 %v171, 7
    %v173 = vsub.s32 0, %v172
    %v174 = vrot.slane %v128, %v173
    %v175 = vlaneseq
    %v176 = vshrl.u32 %v175, 7
    %v177 = vsub.s32 0, %v176
    %v178 = vrot.slane %v129, %v177
    %v179 = vlaneseq
    %v180 = vshrl.u32 %v179, 7
    %v181 = vsub.s32 0, %v180
    %v182 = vrot.slane %v130, %v181
    %v184 = vsel %vm131, %v169, 0
    %v187 = vsel %vm131, %v170, 0
    %189 = vmatprep.subr.mxu0 0.0
    %190 = vmatpush1.msra.mxu0 0.0
    %191 = vmatprep.subr.mxu0 0.0
    %192 = vmatpush1.msra.mxu0 0.0
    %193 = vmatprep.subr.mxu0 0.0
    %194 = vmatpush1.msra.mxu0 0.0
    %195 = vmatprep.subr.mxu0 0.0
    %196 = vmatpush1.msra.mxu0 0.0
    %197 = vmatprep.subr.mxu0 0.0
    %198 = vmatpush1.msra.mxu0 0.0
    %199 = vmatprep.subr.mxu0 0.0
    %200 = vmatpush1.msra.mxu0 0.0
    %201 = vmatprep.subr.mxu0 0.0
    %202 = vmatpush1.msra.mxu0 0.0
    %203 = vmatprep.subr.mxu0 0.0
    %204 = vmatpush1.msra.mxu0 0.0
    %205 = vmatprep.subr.mxu0 0.0
    %206 = vmatpush1.msra.mxu0 0.0
    %207 = vmatprep.subr.mxu0 0.0
    %208 = vmatpush1.msra.mxu0 0.0
    %209 = vmatprep.subr.mxu0 0.0
    %210 = vmatpush1.msra.mxu0 0.0
    %211 = vmatprep.subr.mxu0 0.0
    %212 = vmatpush1.msra.mxu0 0.0
    %213 = vmatprep.subr.mxu0 %v124
    %214 = vmatpush1.msra.mxu0 %v123
    %215 = vmatprep.subr.mxu0 %v119
    %216 = vmatpush1.msra.mxu0 %v118
    %217 = vmatprep.subr.mxu0 %v114
    %218 = vmatpush1.msra.mxu0 %v113
    %219 = vmatprep.subr.mxu0 %v109
    %220 = vmatpush1.msra.mxu0 %v108
    %221 = vmatprep.subr.mxu0 0.0
    %222 = vmatpush2.msra.mxu0 0.0
    %223 = vmatprep.subr.mxu0 0.0
    %224 = vmatpush2.msra.mxu0 0.0
    %225 = vmatprep.subr.mxu0 0.0
    %226 = vmatpush2.msra.mxu0 0.0
    %227 = vmatprep.subr.mxu0 0.0
    %228 = vmatpush2.msra.mxu0 0.0
    %229 = vmatprep.subr.mxu0 0.0
    %230 = vmatpush2.msra.mxu0 0.0
    %231 = vmatprep.subr.mxu0 0.0
    %232 = vmatpush2.msra.mxu0 0.0
    %233 = vmatprep.subr.mxu0 0.0
    %234 = vmatpush2.msra.mxu0 0.0
    %235 = vmatprep.subr.mxu0 0.0
    %236 = vmatpush2.msra.mxu0 0.0
    %237 = vmatprep.subr.mxu0 0.0
    %238 = vmatpush2.msra.mxu0 0.0
    %239 = vmatprep.subr.mxu0 0.0
    %240 = vmatpush2.msra.mxu0 0.0
    %241 = vmatprep.subr.mxu0 0.0
    %242 = vmatpush2.msra.mxu0 0.0
    %243 = vmatprep.subr.mxu0 0.0
    %244 = vmatpush2.msra.mxu0 0.0
    %245 = vmatprep.subr.mxu0 0.0
    %246 = vmatpush2.msra.mxu0 0.0
    %247 = vmatprep.subr.mxu0 0.0
    %248 = vmatpush2.msra.mxu0 0.0
    %249 = vmatprep.subr.mxu0 0.0
    %250 = vmatpush2.msra.mxu0 0.0
    %251 = vmatprep.subr.mxu0 0.0
    %252 = vmatpush2.msra.mxu0 0.0
    %253 = vmatprep.mubr.f32.mxu0 0.0
    %254 = vmatmul.mubr.f32.gmra.mxu0 %v184
    %v255 = vpop.f32.mrf.mxu0
    %v256 = vadd.f32 %v174, %v255
    %v257 = vpop.f32.mrf.mxu0
    %v258 = vadd.f32 %v178, %v257
    %259 = vmatprep.mubr.f32.mxu0 0.0
    %260 = vmatmul.mubr.f32.gmra.mxu0 %v187
    %v261 = vpop.f32.mrf.mxu0
    %v262 = vadd.f32 %v174, %v261
    %v263 = vpop.f32.mrf.mxu0
    %v264 = vadd.f32 %v178, %v263
    %265 = vdwg.mxu0
    %266 = vmatprep.subr.mxu0 0.0
    %267 = vmatpush1.msra.mxu0 0.0
    %268 = vmatprep.subr.mxu0 0.0
    %269 = vmatpush1.msra.mxu0 0.0
    %270 = vmatprep.subr.mxu0 0.0
    %271 = vmatpush1.msra.mxu0 0.0
    %272 = vmatprep.subr.mxu0 0.0
    %273 = vmatpush1.msra.mxu0 0.0
    %274 = vmatprep.subr.mxu0 0.0
    %275 = vmatpush1.msra.mxu0 0.0
    %276 = vmatprep.subr.mxu0 0.0
    %277 = vmatpush1.msra.mxu0 0.0
    %278 = vmatprep.subr.mxu0 0.0
    %279 = vmatpush1.msra.mxu0 0.0
    %280 = vmatprep.subr.mxu0 0.0
    %281 = vmatpush1.msra.mxu0 0.0
    %282 = vmatprep.subr.mxu0 0.0
    %283 = vmatpush1.msra.mxu0 0.0
    %284 = vmatprep.subr.mxu0 0.0
    %285 = vmatpush1.msra.mxu0 0.0
    %286 = vmatprep.subr.mxu0 0.0
    %287 = vmatpush1.msra.mxu0 0.0
    %288 = vmatprep.subr.mxu0 0.0
    %289 = vmatpush1.msra.mxu0 0.0
    %290 = vmatprep.subr.mxu0 0.0
    %291 = vmatpush1.msra.mxu0 %v125
    %292 = vmatprep.subr.mxu0 0.0
    %293 = vmatpush1.msra.mxu0 %v120
    %294 = vmatprep.subr.mxu0 0.0
    %295 = vmatpush1.msra.mxu0 %v115
    %296 = vmatprep.subr.mxu0 0.0
    %297 = vmatpush1.msra.mxu0 %v110
    %298 = vmatprep.subr.mxu0 0.0
    %299 = vmatpush2.msra.mxu0 0.0
    %300 = vmatprep.subr.mxu0 0.0
    %301 = vmatpush2.msra.mxu0 0.0
    %302 = vmatprep.subr.mxu0 0.0
    %303 = vmatpush2.msra.mxu0 0.0
    %304 = vmatprep.subr.mxu0 0.0
    %305 = vmatpush2.msra.mxu0 0.0
    %306 = vmatprep.subr.mxu0 0.0
    %307 = vmatpush2.msra.mxu0 0.0
    %308 = vmatprep.subr.mxu0 0.0
    %309 = vmatpush2.msra.mxu0 0.0
    %310 = vmatprep.subr.mxu0 0.0
    %311 = vmatpush2.msra.mxu0 0.0
    %312 = vmatprep.subr.mxu0 0.0
    %313 = vmatpush2.msra.mxu0 0.0
    %314 = vmatprep.subr.mxu0 0.0
    %315 = vmatpush2.msra.mxu0 0.0
    %316 = vmatprep.subr.mxu0 0.0
    %317 = vmatpush2.msra.mxu0 0.0
    %318 = vmatprep.subr.mxu0 0.0
    %319 = vmatpush2.msra.mxu0 0.0
    %320 = vmatprep.subr.mxu0 0.0
    %321 = vmatpush2.msra.mxu0 0.0
    %322 = vmatprep.subr.mxu0 0.0
    %323 = vmatpush2.msra.mxu0 0.0
    %324 = vmatprep.subr.mxu0 0.0
    %325 = vmatpush2.msra.mxu0 0.0
    %326 = vmatprep.subr.mxu0 0.0
    %327 = vmatpush2.msra.mxu0 0.0
    %328 = vmatprep.subr.mxu0 0.0
    %329 = vmatpush2.msra.mxu0 0.0
    %330 = vmatprep.mubr.f32.mxu0 0.0
    %331 = vmatmul.mubr.f32.gmra.mxu0 %v184
    %v332 = vpop.f32.mrf.mxu0
    %v333 = vadd.f32 %v182, %v332
    %v334 = vpop.f32.mrf.mxu0
    %335 = vmatprep.mubr.f32.mxu0 0.0
    %336 = vmatmul.mubr.f32.gmra.mxu0 %v187
    %v337 = vpop.f32.mrf.mxu0
    %v338 = vadd.f32 %v182, %v337
    %v339 = vpop.f32.mrf.mxu0
    %340 = vdwg.mxu0
    %v341 = vmul.f32 %v258, %v92
    %v342 = vmul.f32 %v264, %v93
    %v343 = vmul.f32 %v258, %v94
    %v344 = vmul.f32 %v264, %v95
    %v345 = vmul.f32 %v258, %v96
    %v346 = vmul.f32 %v264, %v97
    %v347 = vmul.f32 %v258, %v98
    %v348 = vmul.f32 %v264, %v99
    %v349 = vmul.f32 %v333, %v92
    %v350 = vmul.f32 %v338, %v93
    %v351 = vmul.f32 %v333, %v94
    %v352 = vmul.f32 %v338, %v95
    %v353 = vmul.f32 %v333, %v96
    %v354 = vmul.f32 %v338, %v97
    %v355 = vmul.f32 %v333, %v98
    %v356 = vmul.f32 %v338, %v99
    %v358 = vsel %vm131, %v256, 0
    %v361 = vsel %vm131, %v262, 0
    %v364 = vsel %vm131, %v341, 0
    %v367 = vsel %vm131, %v342, 0
    %v370 = vsel %vm131, %v343, 0
    %v373 = vsel %vm131, %v344, 0
    %v376 = vsel %vm131, %v345, 0
    %v379 = vsel %vm131, %v346, 0
    %v382 = vsel %vm131, %v347, 0
    %v385 = vsel %vm131, %v348, 0
    %387 = vmatprep.subr.mxu0 0.0
    %388 = vmatpush1.xpose.msra.mxu0 0.0
    %389 = vmatprep.subr.mxu0 0.0
    %390 = vmatpush1.xpose.msra.mxu0 0.0
    %391 = vmatprep.subr.mxu0 0.0
    %392 = vmatpush1.xpose.msra.mxu0 0.0
    %393 = vmatprep.subr.mxu0 0.0
    %394 = vmatpush1.xpose.msra.mxu0 0.0
    %395 = vmatprep.subr.mxu0 0.0
    %396 = vmatpush1.xpose.msra.mxu0 0.0
    %397 = vmatprep.subr.mxu0 0.0
    %398 = vmatpush1.xpose.msra.mxu0 0.0
    %399 = vmatprep.subr.mxu0 0.0
    %400 = vmatpush1.xpose.msra.mxu0 0.0
    %401 = vmatprep.subr.mxu0 0.0
    %402 = vmatpush1.xpose.msra.mxu0 0.0
    %403 = vmatprep.subr.mxu0 0.0
    %404 = vmatpush1.xpose.msra.mxu0 %v385
    %405 = vmatprep.subr.mxu0 0.0
    %406 = vmatpush1.xpose.msra.mxu0 %v382
    %407 = vmatprep.subr.mxu0 0.0
    %408 = vmatpush1.xpose.msra.mxu0 %v379
    %409 = vmatprep.subr.mxu0 0.0
    %410 = vmatpush1.xpose.msra.mxu0 %v376
    %411 = vmatprep.subr.mxu0 0.0
    %412 = vmatpush1.xpose.msra.mxu0 %v373
    %413 = vmatprep.subr.mxu0 0.0
    %414 = vmatpush1.xpose.msra.mxu0 %v370
    %415 = vmatprep.subr.mxu0 0.0
    %416 = vmatpush1.xpose.msra.mxu0 %v367
    %417 = vmatprep.subr.mxu0 0.0
    %418 = vmatpush1.xpose.msra.mxu0 %v364
    %419 = vmatprep.subr.mxu0 0.0
    %420 = vmatpush2.xpose.msra.mxu0 0.0
    %421 = vmatprep.subr.mxu0 0.0
    %422 = vmatpush2.xpose.msra.mxu0 0.0
    %423 = vmatprep.subr.mxu0 0.0
    %424 = vmatpush2.xpose.msra.mxu0 0.0
    %425 = vmatprep.subr.mxu0 0.0
    %426 = vmatpush2.xpose.msra.mxu0 0.0
    %427 = vmatprep.subr.mxu0 0.0
    %428 = vmatpush2.xpose.msra.mxu0 0.0
    %429 = vmatprep.subr.mxu0 0.0
    %430 = vmatpush2.xpose.msra.mxu0 0.0
    %431 = vmatprep.subr.mxu0 0.0
    %432 = vmatpush2.xpose.msra.mxu0 0.0
    %433 = vmatprep.subr.mxu0 0.0
    %434 = vmatpush2.xpose.msra.mxu0 0.0
    %435 = vmatprep.subr.mxu0 0.0
    %436 = vmatpush2.xpose.msra.mxu0 0.0
    %437 = vmatprep.subr.mxu0 0.0
    %438 = vmatpush2.xpose.msra.mxu0 0.0
    %439 = vmatprep.subr.mxu0 0.0
    %440 = vmatpush2.xpose.msra.mxu0 0.0
    %441 = vmatprep.subr.mxu0 0.0
    %442 = vmatpush2.xpose.msra.mxu0 0.0
    %443 = vmatprep.subr.mxu0 0.0
    %444 = vmatpush2.xpose.msra.mxu0 0.0
    %445 = vmatprep.subr.mxu0 0.0
    %446 = vmatpush2.xpose.msra.mxu0 0.0
    %447 = vmatprep.subr.mxu0 0.0
    %448 = vmatpush2.xpose.msra.mxu0 0.0
    %449 = vmatprep.subr.mxu0 0.0
    %450 = vmatpush2.xpose.msra.mxu0 0.0
    %451 = vmatprep.mubr.f32.mxu0 0.0
    %452 = vmatmul.mubr.f32.gmra.mxu0 %v358
    %v453 = vpop.f32.mrf.mxu0
    %v454 = vadd.f32 %v90, %v453
    %v455 = vpop.f32.mrf.mxu0
    %456 = vmatprep.mubr.f32.mxu0 0.0
    %457 = vmatmul.mubr.f32.gmra.mxu0 %v361
    %v458 = vpop.f32.mrf.mxu0
    %v459 = vadd.f32 %v91, %v458
    %v460 = vpop.f32.mrf.mxu0
    %461 = vdwg.mxu0
    %vm462 = vcmask 523264
    %v463 = vsel %vm462, %v454, -inf
    %464 = vmax.xlane.f32.xlu0 %v463
    %v465 = vpop.xlane.xlu0 %464
    %v466 = vsel %vm462, %v459, -inf
    %467 = vmax.xlane.f32.xlu0 %v466
    %v468 = vpop.xlane.xlu0 %467
    %v469 = vsub.f32 %v454, %v465
    %v470 = vsub.f32 %v459, %v468
    %v471 = vmul.f32 %v469, 1.442695
    %v472 = vpow.pop %v471
    %v473 = vmul.f32 %v470, 1.442695
    %v474 = vpow.pop %v473
    %v476 = vsel %vm462, %v472, 0
    %v479 = vsel %vm462, %v474, 0
    %481 = vmatprep.subr.mxu0 0.0
    %482 = vmatpush1.msra.mxu0 0.0
    %483 = vmatprep.subr.mxu0 0.0
    %484 = vmatpush1.msra.mxu0 0.0
    %485 = vmatprep.subr.mxu0 0.0
    %486 = vmatpush1.msra.mxu0 0.0
    %487 = vmatprep.subr.mxu0 0.0
    %488 = vmatpush1.msra.mxu0 0.0
    %489 = vmatprep.subr.mxu0 0.0
    %490 = vmatpush1.msra.mxu0 0.0
    %491 = vmatprep.subr.mxu0 0.0
    %492 = vmatpush1.msra.mxu0 0.0
    %493 = vmatprep.subr.mxu0 0.0
    %494 = vmatpush1.msra.mxu0 0.0
    %495 = vmatprep.subr.mxu0 0.0
    %496 = vmatpush1.msra.mxu0 0.0
    %497 = vmatprep.subr.mxu0 0.0
    %498 = vmatpush1.msra.mxu0 %v107
    %499 = vmatprep.subr.mxu0 0.0
    %500 = vmatpush1.msra.mxu0 %v106
    %501 = vmatprep.subr.mxu0 0.0
    %502 = vmatpush1.msra.mxu0 %v105
    %503 = vmatprep.subr.mxu0 0.0
    %504 = vmatpush1.msra.mxu0 %v104
    %505 = vmatprep.subr.mxu0 0.0
    %506 = vmatpush1.msra.mxu0 %v103
    %507 = vmatprep.subr.mxu0 0.0
    %508 = vmatpush1.msra.mxu0 %v102
    %509 = vmatprep.subr.mxu0 0.0
    %510 = vmatpush1.msra.mxu0 %v101
    %511 = vmatprep.subr.mxu0 0.0
    %512 = vmatpush1.msra.mxu0 %v100
    %513 = vmatprep.subr.mxu0 0.0
    %514 = vmatpush2.msra.mxu0 0.0
    %515 = vmatprep.subr.mxu0 0.0
    %516 = vmatpush2.msra.mxu0 0.0
    %517 = vmatprep.subr.mxu0 0.0
    %518 = vmatpush2.msra.mxu0 0.0
    %519 = vmatprep.subr.mxu0 0.0
    %520 = vmatpush2.msra.mxu0 0.0
    %521 = vmatprep.subr.mxu0 0.0
    %522 = vmatpush2.msra.mxu0 0.0
    %523 = vmatprep.subr.mxu0 0.0
    %524 = vmatpush2.msra.mxu0 0.0
    %525 = vmatprep.subr.mxu0 0.0
    %526 = vmatpush2.msra.mxu0 0.0
    %527 = vmatprep.subr.mxu0 0.0
    %528 = vmatpush2.msra.mxu0 0.0
    %529 = vmatprep.subr.mxu0 0.0
    %530 = vmatpush2.msra.mxu0 0.0
    %531 = vmatprep.subr.mxu0 0.0
    %532 = vmatpush2.msra.mxu0 0.0
    %533 = vmatprep.subr.mxu0 0.0
    %534 = vmatpush2.msra.mxu0 0.0
    %535 = vmatprep.subr.mxu0 0.0
    %536 = vmatpush2.msra.mxu0 0.0
    %537 = vmatprep.subr.mxu0 0.0
    %538 = vmatpush2.msra.mxu0 0.0
    %539 = vmatprep.subr.mxu0 0.0
    %540 = vmatpush2.msra.mxu0 0.0
    %541 = vmatprep.subr.mxu0 0.0
    %542 = vmatpush2.msra.mxu0 0.0
    %543 = vmatprep.subr.mxu0 0.0
    %544 = vmatpush2.msra.mxu0 0.0
    %545 = vmatprep.mubr.f32.mxu0 0.0
    %546 = vmatmul.mubr.f32.gmra.mxu0 %v476
    %v547 = vpop.f32.mrf.mxu0
    %v548 = vadd.f32 0.0, %v547
    %v549 = vpop.f32.mrf.mxu0
    %550 = vmatprep.mubr.f32.mxu0 0.0
    %551 = vmatmul.mubr.f32.gmra.mxu0 %v479
    %v552 = vpop.f32.mrf.mxu0
    %v553 = vadd.f32 0.0, %v552
    %v554 = vpop.f32.mrf.mxu0
    %555 = vdwg.mxu0
    %v556 = vrcp.pop %v548
    %v557 = vrcp.pop %v553
    %v558 = vmul.f32 %v472, %v556
    %v559 = vmul.f32 %v474, %v557
    %v561 = vsel %vm462, %v558, 0
    %v564 = vsel %vm462, %v559, 0
    %566 = vmatprep.subr.mxu0 0.0
    %567 = vmatpush1.msra.mxu0 0.0
    %568 = vmatprep.subr.mxu0 0.0
    %569 = vmatpush1.msra.mxu0 0.0
    %570 = vmatprep.subr.mxu0 0.0
    %571 = vmatpush1.msra.mxu0 0.0
    %572 = vmatprep.subr.mxu0 0.0
    %573 = vmatpush1.msra.mxu0 0.0
    %574 = vmatprep.subr.mxu0 0.0
    %575 = vmatpush1.msra.mxu0 0.0
    %576 = vmatprep.subr.mxu0 0.0
    %577 = vmatpush1.msra.mxu0 0.0
    %578 = vmatprep.subr.mxu0 0.0
    %579 = vmatpush1.msra.mxu0 0.0
    %580 = vmatprep.subr.mxu0 0.0
    %581 = vmatpush1.msra.mxu0 0.0
    %582 = vmatprep.subr.mxu0 0.0
    %583 = vmatpush1.msra.mxu0 %v356
    %584 = vmatprep.subr.mxu0 0.0
    %585 = vmatpush1.msra.mxu0 %v355
    %586 = vmatprep.subr.mxu0 0.0
    %587 = vmatpush1.msra.mxu0 %v354
    %588 = vmatprep.subr.mxu0 0.0
    %589 = vmatpush1.msra.mxu0 %v353
    %590 = vmatprep.subr.mxu0 0.0
    %591 = vmatpush1.msra.mxu0 %v352
    %592 = vmatprep.subr.mxu0 0.0
    %593 = vmatpush1.msra.mxu0 %v351
    %594 = vmatprep.subr.mxu0 0.0
    %595 = vmatpush1.msra.mxu0 %v350
    %596 = vmatprep.subr.mxu0 0.0
    %597 = vmatpush1.msra.mxu0 %v349
    %598 = vmatprep.subr.mxu0 0.0
    %599 = vmatpush2.msra.mxu0 0.0
    %600 = vmatprep.subr.mxu0 0.0
    %601 = vmatpush2.msra.mxu0 0.0
    %602 = vmatprep.subr.mxu0 0.0
    %603 = vmatpush2.msra.mxu0 0.0
    %604 = vmatprep.subr.mxu0 0.0
    %605 = vmatpush2.msra.mxu0 0.0
    %606 = vmatprep.subr.mxu0 0.0
    %607 = vmatpush2.msra.mxu0 0.0
    %608 = vmatprep.subr.mxu0 0.0
    %609 = vmatpush2.msra.mxu0 0.0
    %610 = vmatprep.subr.mxu0 0.0
    %611 = vmatpush2.msra.mxu0 0.0
    %612 = vmatprep.subr.mxu0 0.0
    %613 = vmatpush2.msra.mxu0 0.0
    %614 = vmatprep.subr.mxu0 0.0
    %615 = vmatpush2.msra.mxu0 0.0
    %616 = vmatprep.subr.mxu0 0.0
    %617 = vmatpush2.msra.mxu0 0.0
    %618 = vmatprep.subr.mxu0 0.0
    %619 = vmatpush2.msra.mxu0 0.0
    %620 = vmatprep.subr.mxu0 0.0
    %621 = vmatpush2.msra.mxu0 0.0
    %622 = vmatprep.subr.mxu0 0.0
    %623 = vmatpush2.msra.mxu0 0.0
    %624 = vmatprep.subr.mxu0 0.0
    %625 = vmatpush2.msra.mxu0 0.0
    %626 = vmatprep.subr.mxu0 0.0
    %627 = vmatpush2.msra.mxu0 0.0
    %628 = vmatprep.subr.mxu0 0.0
    %629 = vmatpush2.msra.mxu0 0.0
    %630 = vmatprep.mubr.f32.mxu0 0.0
    %631 = vmatmul.mubr.f32.gmra.mxu0 %v561
    %v632 = vpop.f32.mrf.mxu0
    %v633 = vadd.f32 0.0, %v632
    %v634 = vpop.f32.mrf.mxu0
    %635 = vmatprep.mubr.f32.mxu0 0.0
    %636 = vmatmul.mubr.f32.gmra.mxu0 %v564
    %v637 = vpop.f32.mrf.mxu0
    %v638 = vadd.f32 0.0, %v637
    %v639 = vpop.f32.mrf.mxu0
    %640 = vdwg.mxu0
    %v641 = vlaneseq
    %v642 = vshrl.u32 %v641, 7
    %v643 = vsub.s32 6, %v642
    %v644 = vrot.slane %v128, %v643
    %v646 = vsel %vm131, %v633, 0
    %v649 = vsel %vm131, %v638, 0
    %651 = vmatprep.subr.mxu0 0.0
    %652 = vmatpush1.msra.mxu0 0.0
    %653 = vmatprep.subr.mxu0 0.0
    %654 = vmatpush1.msra.mxu0 0.0
    %655 = vmatprep.subr.mxu0 0.0
    %656 = vmatpush1.msra.mxu0 0.0
    %657 = vmatprep.subr.mxu0 0.0
    %658 = vmatpush1.msra.mxu0 0.0
    %659 = vmatprep.subr.mxu0 0.0
    %660 = vmatpush1.msra.mxu0 0.0
    %661 = vmatprep.subr.mxu0 0.0
    %662 = vmatpush1.msra.mxu0 0.0
    %663 = vmatprep.subr.mxu0 0.0
    %664 = vmatpush1.msra.mxu0 0.0
    %665 = vmatprep.subr.mxu0 0.0
    %666 = vmatpush1.msra.mxu0 0.0
    %667 = vmatprep.subr.mxu0 0.0
    %668 = vmatpush1.msra.mxu0 0.0
    %669 = vmatprep.subr.mxu0 0.0
    %670 = vmatpush1.msra.mxu0 0.0
    %671 = vmatprep.subr.mxu0 0.0
    %672 = vmatpush1.msra.mxu0 0.0
    %673 = vmatprep.subr.mxu0 0.0
    %674 = vmatpush1.msra.mxu0 0.0
    %675 = vmatprep.subr.mxu0 0.0
    %676 = vmatpush1.msra.mxu0 %v126
    %677 = vmatprep.subr.mxu0 0.0
    %678 = vmatpush1.msra.mxu0 %v121
    %679 = vmatprep.subr.mxu0 0.0
    %680 = vmatpush1.msra.mxu0 %v116
    %681 = vmatprep.subr.mxu0 0.0
    %682 = vmatpush1.msra.mxu0 %v111
    %683 = vmatprep.subr.mxu0 0.0
    %684 = vmatpush2.msra.mxu0 0.0
    %685 = vmatprep.subr.mxu0 0.0
    %686 = vmatpush2.msra.mxu0 0.0
    %687 = vmatprep.subr.mxu0 0.0
    %688 = vmatpush2.msra.mxu0 0.0
    %689 = vmatprep.subr.mxu0 0.0
    %690 = vmatpush2.msra.mxu0 0.0
    %691 = vmatprep.subr.mxu0 0.0
    %692 = vmatpush2.msra.mxu0 0.0
    %693 = vmatprep.subr.mxu0 0.0
    %694 = vmatpush2.msra.mxu0 0.0
    %695 = vmatprep.subr.mxu0 0.0
    %696 = vmatpush2.msra.mxu0 0.0
    %697 = vmatprep.subr.mxu0 0.0
    %698 = vmatpush2.msra.mxu0 0.0
    %699 = vmatprep.subr.mxu0 0.0
    %700 = vmatpush2.msra.mxu0 0.0
    %701 = vmatprep.subr.mxu0 0.0
    %702 = vmatpush2.msra.mxu0 0.0
    %703 = vmatprep.subr.mxu0 0.0
    %704 = vmatpush2.msra.mxu0 0.0
    %705 = vmatprep.subr.mxu0 0.0
    %706 = vmatpush2.msra.mxu0 0.0
    %707 = vmatprep.subr.mxu0 0.0
    %708 = vmatpush2.msra.mxu0 0.0
    %709 = vmatprep.subr.mxu0 0.0
    %710 = vmatpush2.msra.mxu0 0.0
    %711 = vmatprep.subr.mxu0 0.0
    %712 = vmatpush2.msra.mxu0 0.0
    %713 = vmatprep.subr.mxu0 0.0
    %714 = vmatpush2.msra.mxu0 0.0
    %715 = vmatprep.mubr.f32.mxu0 0.0
    %716 = vmatmul.mubr.f32.gmra.mxu0 %v646
    %v717 = vpop.f32.mrf.mxu0
    %v718 = vadd.f32 %v644, %v717
    %v719 = vpop.f32.mrf.mxu0
    %720 = vmatprep.mubr.f32.mxu0 0.0
    %721 = vmatmul.mubr.f32.gmra.mxu0 %v649
    %v722 = vpop.f32.mrf.mxu0
    %v723 = vadd.f32 %v644, %v722
    %v724 = vpop.f32.mrf.mxu0
    %725 = vdwg.mxu0
    %v726 = vadd.f32 %v88, %v718
    %v727 = vadd.f32 %v89, %v723
    %v728 = vsel %vm131, %v726, 0.0
    %729 = vadd.xlane.f32.xlu0 %v728
    %v730 = vpop.xlane.xlu0 %729
    %v731 = vsel %vm131, %v727, 0.0
    %732 = vadd.xlane.f32.xlu0 %v731
    %v733 = vpop.xlane.xlu0 %732
    %v734 = vmul.f32 %v730, %v138
    %v735 = vmul.f32 %v733, %v138
    %v736 = vsub.f32 %v726, %v734
    %v737 = vsub.f32 %v727, %v735
    %v738 = vmul.f32 %v736, %v736
    %v739 = vmul.f32 %v737, %v737
    %v740 = vsel %vm131, %v738, 0.0
    %741 = vadd.xlane.f32.xlu0 %v740
    %v742 = vpop.xlane.xlu0 %741
    %v743 = vsel %vm131, %v739, 0.0
    %744 = vadd.xlane.f32.xlu0 %v743
    %v745 = vpop.xlane.xlu0 %744
    %v746 = vmul.f32 %v742, %v138
    %v747 = vmul.f32 %v745, %v138
    %v748 = vadd.f32 %v746, 1e-05
    %v749 = vadd.f32 %v747, 1e-05
    %v750 = vrsqrt.pop %v748
    %v751 = vrsqrt.pop %v749
    %v752 = vmul.f32 %v736, %v750
    %v753 = vmul.f32 %v737, %v751
    %v754 = vlaneseq
    %v755 = vshrl.u32 %v754, 7
    %v756 = vsub.s32 4, %v755
    %v757 = vrot.slane %v128, %v756
    %v758 = vmul.f32 %v752, %v757
    %v759 = vmul.f32 %v753, %v757
    %v760 = vlaneseq
    %v761 = vshrl.u32 %v760, 7
    %v762 = vsub.s32 5, %v761
    %v763 = vrot.slane %v128, %v762
    %v764 = vadd.f32 %v758, %v763
    %v765 = vadd.f32 %v759, %v763
    %v766 = vlaneseq
    %v767 = vshrl.u32 %v766, 7
    %v768 = vsub.s32 1, %v767
    %v769 = vrot.slane %v128, %v768
    %v771 = vsel %vm131, %v764, 0
    %v774 = vsel %vm131, %v765, 0
    %776 = vmatprep.subr.mxu0 0.0
    %777 = vmatpush1.msra.mxu0 0.0
    %778 = vmatprep.subr.mxu0 0.0
    %779 = vmatpush1.msra.mxu0 0.0
    %780 = vmatprep.subr.mxu0 0.0
    %781 = vmatpush1.msra.mxu0 0.0
    %782 = vmatprep.subr.mxu0 0.0
    %783 = vmatpush1.msra.mxu0 0.0
    %784 = vmatprep.subr.mxu0 0.0
    %785 = vmatpush1.msra.mxu0 0.0
    %786 = vmatprep.subr.mxu0 0.0
    %787 = vmatpush1.msra.mxu0 0.0
    %788 = vmatprep.subr.mxu0 0.0
    %789 = vmatpush1.msra.mxu0 0.0
    %790 = vmatprep.subr.mxu0 0.0
    %791 = vmatpush1.msra.mxu0 0.0
    %792 = vmatprep.subr.mxu0 0.0
    %793 = vmatpush1.msra.mxu0 0.0
    %794 = vmatprep.subr.mxu0 0.0
    %795 = vmatpush1.msra.mxu0 0.0
    %796 = vmatprep.subr.mxu0 0.0
    %797 = vmatpush1.msra.mxu0 0.0
    %798 = vmatprep.subr.mxu0 0.0
    %799 = vmatpush1.msra.mxu0 0.0
    %800 = vmatprep.subr.mxu0 0.0
    %801 = vmatpush1.msra.mxu0 %v127
    %802 = vmatprep.subr.mxu0 0.0
    %803 = vmatpush1.msra.mxu0 %v122
    %804 = vmatprep.subr.mxu0 0.0
    %805 = vmatpush1.msra.mxu0 %v117
    %806 = vmatprep.subr.mxu0 0.0
    %807 = vmatpush1.msra.mxu0 %v112
    %808 = vmatprep.subr.mxu0 0.0
    %809 = vmatpush2.msra.mxu0 0.0
    %810 = vmatprep.subr.mxu0 0.0
    %811 = vmatpush2.msra.mxu0 0.0
    %812 = vmatprep.subr.mxu0 0.0
    %813 = vmatpush2.msra.mxu0 0.0
    %814 = vmatprep.subr.mxu0 0.0
    %815 = vmatpush2.msra.mxu0 0.0
    %816 = vmatprep.subr.mxu0 0.0
    %817 = vmatpush2.msra.mxu0 0.0
    %818 = vmatprep.subr.mxu0 0.0
    %819 = vmatpush2.msra.mxu0 0.0
    %820 = vmatprep.subr.mxu0 0.0
    %821 = vmatpush2.msra.mxu0 0.0
    %822 = vmatprep.subr.mxu0 0.0
    %823 = vmatpush2.msra.mxu0 0.0
    %824 = vmatprep.subr.mxu0 0.0
    %825 = vmatpush2.msra.mxu0 0.0
    %826 = vmatprep.subr.mxu0 0.0
    %827 = vmatpush2.msra.mxu0 0.0
    %828 = vmatprep.subr.mxu0 0.0
    %829 = vmatpush2.msra.mxu0 0.0
    %830 = vmatprep.subr.mxu0 0.0
    %831 = vmatpush2.msra.mxu0 0.0
    %832 = vmatprep.subr.mxu0 0.0
    %833 = vmatpush2.msra.mxu0 0.0
    %834 = vmatprep.subr.mxu0 0.0
    %835 = vmatpush2.msra.mxu0 0.0
    %836 = vmatprep.subr.mxu0 0.0
    %837 = vmatpush2.msra.mxu0 0.0
    %838 = vmatprep.subr.mxu0 0.0
    %839 = vmatpush2.msra.mxu0 0.0
    %840 = vmatprep.mubr.f32.mxu0 0.0
    %841 = vmatmul.mubr.f32.gmra.mxu0 %v771
    %v842 = vpop.f32.mrf.mxu0
    %v843 = vadd.f32 %v769, %v842
    %v844 = vpop.f32.mrf.mxu0
    %845 = vmatprep.mubr.f32.mxu0 0.0
    %846 = vmatmul.mubr.f32.gmra.mxu0 %v774
    %v847 = vpop.f32.mrf.mxu0
    %v848 = vadd.f32 %v769, %v847
    %v849 = vpop.f32.mrf.mxu0
    %850 = vdwg.mxu0
    %v851 = vmax.f32 %v843, 0.0
    %v852 = vmax.f32 %v848, 0.0
    %v853 = vld [vmem:[%s5] sm:$0xff]
    %v854 = vld [vmem:[%s5 + $0x8] sm:$0xff]
    %v855 = vld [vmem:[%s5 + $0x10] sm:$0xff]
    %v856 = vld [vmem:[%s5 + $0x18] sm:$0xff]
    %v857 = vld [vmem:[%s5 + $0x20] sm:$0xff]
    %v858 = vld [vmem:[%s5 + $0x28] sm:$0xff]
    %v859 = vld [vmem:[%s5 + $0x30] sm:$0xff]
    %v860 = vld [vmem:[%s5 + $0x38] sm:$0xff]
    %v861 = vld [vmem:[%s5 + $0x40] sm:$0xff]
    %v862 = vld [vmem:[%s5 + $0x48] sm:$0xff]
    %v863 = vld [vmem:[%s5 + $0x50] sm:$0xff]
    %v864 = vld [vmem:[%s5 + $0x58] sm:$0xff]
    %v865 = vld [vmem:[%s5 + $0x60] sm:$0xff]
    %v866 = vld [vmem:[%s5 + $0x68] sm:$0xff]
    %v867 = vld [vmem:[%s5 + $0x70] sm:$0xff]
    %v868 = vld [vmem:[%s5 + $0x78] sm:$0xff]
    %v869 = vlaneseq
    %v870 = vshrl.u32 %v869, 7
    %v871 = vsub.s32 7, %v870
    %v872 = vrot.slane %v128, %v871
    %873 = vmatprep.subr.mxu0 0.0
    %874 = vmatpush1.msra.mxu0 %v868
    %875 = vmatprep.subr.mxu0 0.0
    %876 = vmatpush1.msra.mxu0 %v867
    %877 = vmatprep.subr.mxu0 0.0
    %878 = vmatpush1.msra.mxu0 %v866
    %879 = vmatprep.subr.mxu0 0.0
    %880 = vmatpush1.msra.mxu0 %v865
    %881 = vmatprep.subr.mxu0 0.0
    %882 = vmatpush1.msra.mxu0 %v864
    %883 = vmatprep.subr.mxu0 0.0
    %884 = vmatpush1.msra.mxu0 %v863
    %885 = vmatprep.subr.mxu0 0.0
    %886 = vmatpush1.msra.mxu0 %v862
    %887 = vmatprep.subr.mxu0 0.0
    %888 = vmatpush1.msra.mxu0 %v861
    %889 = vmatprep.subr.mxu0 0.0
    %890 = vmatpush1.msra.mxu0 %v860
    %891 = vmatprep.subr.mxu0 0.0
    %892 = vmatpush1.msra.mxu0 %v859
    %893 = vmatprep.subr.mxu0 0.0
    %894 = vmatpush1.msra.mxu0 %v858
    %895 = vmatprep.subr.mxu0 0.0
    %896 = vmatpush1.msra.mxu0 %v857
    %897 = vmatprep.subr.mxu0 0.0
    %898 = vmatpush1.msra.mxu0 %v856
    %899 = vmatprep.subr.mxu0 0.0
    %900 = vmatpush1.msra.mxu0 %v855
    %901 = vmatprep.subr.mxu0 0.0
    %902 = vmatpush1.msra.mxu0 %v854
    %903 = vmatprep.subr.mxu0 0.0
    %904 = vmatpush1.msra.mxu0 %v853
    %905 = vmatprep.subr.mxu0 0.0
    %906 = vmatpush2.msra.mxu0 0.0
    %907 = vmatprep.subr.mxu0 0.0
    %908 = vmatpush2.msra.mxu0 0.0
    %909 = vmatprep.subr.mxu0 0.0
    %910 = vmatpush2.msra.mxu0 0.0
    %911 = vmatprep.subr.mxu0 0.0
    %912 = vmatpush2.msra.mxu0 0.0
    %913 = vmatprep.subr.mxu0 0.0
    %914 = vmatpush2.msra.mxu0 0.0
    %915 = vmatprep.subr.mxu0 0.0
    %916 = vmatpush2.msra.mxu0 0.0
    %917 = vmatprep.subr.mxu0 0.0
    %918 = vmatpush2.msra.mxu0 0.0
    %919 = vmatprep.subr.mxu0 0.0
    %920 = vmatpush2.msra.mxu0 0.0
    %921 = vmatprep.subr.mxu0 0.0
    %922 = vmatpush2.msra.mxu0 0.0
    %923 = vmatprep.subr.mxu0 0.0
    %924 = vmatpush2.msra.mxu0 0.0
    %925 = vmatprep.subr.mxu0 0.0
    %926 = vmatpush2.msra.mxu0 0.0
    %927 = vmatprep.subr.mxu0 0.0
    %928 = vmatpush2.msra.mxu0 0.0
    %929 = vmatprep.subr.mxu0 0.0
    %930 = vmatpush2.msra.mxu0 0.0
    %931 = vmatprep.subr.mxu0 0.0
    %932 = vmatpush2.msra.mxu0 0.0
    %933 = vmatprep.subr.mxu0 0.0
    %934 = vmatpush2.msra.mxu0 0.0
    %935 = vmatprep.subr.mxu0 0.0
    %936 = vmatpush2.msra.mxu0 0.0
    %937 = vmatprep.mubr.f32.mxu0 0.0
    %938 = vmatmul.mubr.f32.gmra.mxu0 %v851
    %v939 = vpop.f32.mrf.mxu0
    %v940 = vadd.f32 %v872, %v939
    %v941 = vpop.f32.mrf.mxu0
    %942 = vmatprep.mubr.f32.mxu0 0.0
    %943 = vmatmul.mubr.f32.gmra.mxu0 %v852
    %v944 = vpop.f32.mrf.mxu0
    %v945 = vadd.f32 %v872, %v944
    %v946 = vpop.f32.mrf.mxu0
    %947 = vdwg.mxu0
    %v948 = vadd.f32 %v726, %v940
    %v949 = vadd.f32 %v727, %v945
    %s950 = scalar_lea.vmem %s4, 160
    %v951 = vld [vmem:[%s950] sm:$0xff]
    %v952 = vld [vmem:[%s950 + $0x8] sm:$0xff]
    %v953 = vld [vmem:[%s950 + $0x10] sm:$0xff]
    %v954 = vld [vmem:[%s950 + $0x18] sm:$0xff]
    %v955 = vld [vmem:[%s950 + $0x20] sm:$0xff]
    %v956 = vld [vmem:[%s950 + $0x28] sm:$0xff]
    %v957 = vld [vmem:[%s950 + $0x30] sm:$0xff]
    %v958 = vld [vmem:[%s950 + $0x38] sm:$0xff]
    %v959 = vld [vmem:[%s950 + $0x40] sm:$0xff]
    %v960 = vld [vmem:[%s950 + $0x48] sm:$0xff]
    %v961 = vld [vmem:[%s950 + $0x50] sm:$0xff]
    %v962 = vld [vmem:[%s950 + $0x58] sm:$0xff]
    %v963 = vld [vmem:[%s950 + $0x60] sm:$0xff]
    %v964 = vld [vmem:[%s950 + $0x68] sm:$0xff]
    %v965 = vld [vmem:[%s950 + $0x70] sm:$0xff]
    %v966 = vld [vmem:[%s950 + $0x78] sm:$0xff]
    %v967 = vld [vmem:[%s950 + $0x80] sm:$0xff]
    %v968 = vld [vmem:[%s950 + $0x88] sm:$0xff]
    %v969 = vld [vmem:[%s950 + $0x90] sm:$0xff]
    %v970 = vld [vmem:[%s950 + $0x98] sm:$0xff]
    %s971 = scalar_lea.vmem [#allocation8], 24
    %v972 = vld [vmem:[%s971] sm:$0xff]
    %v973 = vld [vmem:[%s971 + $0x8] sm:$0xff]
    %v974 = vld [vmem:[%s971 + $0x10] sm:$0xff]
    %v975 = vsel %vm131, %v948, 0.0
    %976 = vadd.xlane.f32.xlu0 %v975
    %v977 = vpop.xlane.xlu0 %976
    %v978 = vsel %vm131, %v949, 0.0
    %979 = vadd.xlane.f32.xlu0 %v978
    %v980 = vpop.xlane.xlu0 %979
    %v981 = vmul.f32 %v977, %v138
    %v982 = vmul.f32 %v980, %v138
    %v983 = vsub.f32 %v948, %v981
    %v984 = vsub.f32 %v949, %v982
    %v985 = vmul.f32 %v983, %v983
    %v986 = vmul.f32 %v984, %v984
    %v987 = vsel %vm131, %v985, 0.0
    %988 = vadd.xlane.f32.xlu0 %v987
    %v989 = vpop.xlane.xlu0 %988
    %v990 = vsel %vm131, %v986, 0.0
    %991 = vadd.xlane.f32.xlu0 %v990
    %v992 = vpop.xlane.xlu0 %991
    %v993 = vmul.f32 %v989, %v138
    %v994 = vmul.f32 %v992, %v138
    %v995 = vadd.f32 %v993, 1e-05
    %v996 = vadd.f32 %v994, 1e-05
    %v997 = vrsqrt.pop %v995
    %v998 = vrsqrt.pop %v996
    %v999 = vmul.f32 %v983, %v997
    %v1000 = vmul.f32 %v984, %v998
    %v1001 = vlaneseq
    %v1002 = vshrl.u32 %v1001, 7
    %v1003 = vsub.s32 2, %v1002
    %v1004 = vrot.slane %v972, %v1003
    %v1005 = vmul.f32 %v999, %v1004
    %v1006 = vmul.f32 %v1000, %v1004
    %v1007 = vlaneseq
    %v1008 = vshrl.u32 %v1007, 7
    %v1009 = vsub.s32 3, %v1008
    %v1010 = vrot.slane %v972, %v1009
    %v1011 = vadd.f32 %v1005, %v1010
    %v1012 = vadd.f32 %v1006, %v1010
    %v1013 = vlaneseq
    %v1014 = vshrl.u32 %v1013, 7
    %v1015 = vsub.s32 0, %v1014
    %v1016 = vrot.slane %v972, %v1015
    %v1017 = vlaneseq
    %v1018 = vshrl.u32 %v1017, 7
    %v1019 = vsub.s32 0, %v1018
    %v1020 = vrot.slane %v973, %v1019
    %v1021 = vlaneseq
    %v1022 = vshrl.u32 %v1021, 7
    %v1023 = vsub.s32 0, %v1022
    %v1024 = vrot.slane %v974, %v1023
    %v1026 = vsel %vm131, %v1011, 0
    %v1029 = vsel %vm131, %v1012, 0
    %1031 = vmatprep.subr.mxu0 0.0
    %1032 = vmatpush1.msra.mxu0 0.0
    %1033 = vmatprep.subr.mxu0 0.0
    %1034 = vmatpush1.msra.mxu0 0.0
    %1035 = vmatprep.subr.mxu0 0.0
    %1036 = vmatpush1.msra.mxu0 0.0
    %1037 = vmatprep.subr.mxu0 0.0
    %1038 = vmatpush1.msra.mxu0 0.0
    %1039 = vmatprep.subr.mxu0 0.0
    %1040 = vmatpush1.msra.mxu0 0.0
    %1041 = vmatprep.subr.mxu0 0.0
    %1042 = vmatpush1.msra.mxu0 0.0
    %1043 = vmatprep.subr.mxu0 0.0
    %1044 = vmatpush1.msra.mxu0 0.0
    %1045 = vmatprep.subr.mxu0 0.0
    %1046 = vmatpush1.msra.mxu0 0.0
    %1047 = vmatprep.subr.mxu0 0.0
    %1048 = vmatpush1.msra.mxu0 0.0
    %1049 = vmatprep.subr.mxu0 0.0
    %1050 = vmatpush1.msra.mxu0 0.0
    %1051 = vmatprep.subr.mxu0 0.0
    %1052 = vmatpush1.msra.mxu0 0.0
    %1053 = vmatprep.subr.mxu0 0.0
    %1054 = vmatpush1.msra.mxu0 0.0
    %1055 = vmatprep.subr.mxu0 %v967
    %1056 = vmatpush1.msra.mxu0 %v966
    %1057 = vmatprep.subr.mxu0 %v962
    %1058 = vmatpush1.msra.mxu0 %v961
    %1059 = vmatprep.subr.mxu0 %v957
    %1060 = vmatpush1.msra.mxu0 %v956
    %1061 = vmatprep.subr.mxu0 %v952
    %1062 = vmatpush1.msra.mxu0 %v951
    %1063 = vmatprep.subr.mxu0 0.0
    %1064 = vmatpush2.msra.mxu0 0.0
    %1065 = vmatprep.subr.mxu0 0.0
    %1066 = vmatpush2.msra.mxu0 0.0
    %1067 = vmatprep.subr.mxu0 0.0
    %1068 = vmatpush2.msra.mxu0 0.0
    %1069 = vmatprep.subr.mxu0 0.0
    %1070 = vmatpush2.msra.mxu0 0.0
    %1071 = vmatprep.subr.mxu0 0.0
    %1072 = vmatpush2.msra.mxu0 0.0
    %1073 = vmatprep.subr.mxu0 0.0
    %1074 = vmatpush2.msra.mxu0 0.0
    %1075 = vmatprep.subr.mxu0 0.0
    %1076 = vmatpush2.msra.mxu0 0.0
    %1077 = vmatprep.subr.mxu0 0.0
    %1078 = vmatpush2.msra.mxu0 0.0
    %1079 = vmatprep.subr.mxu0 0.0
    %1080 = vmatpush2.msra.mxu0 0.0
    %1081 = vmatprep.subr.mxu0 0.0
    %1082 = vmatpush2.msra.mxu0 0.0
    %1083 = vmatprep.subr.mxu0 0.0
    %1084 = vmatpush2.msra.mxu0 0.0
    %1085 = vmatprep.subr.mxu0 0.0
    %1086 = vmatpush2.msra.mxu0 0.0
    %1087 = vmatprep.subr.mxu0 0.0
    %1088 = vmatpush2.msra.mxu0 0.0
    %1089 = vmatprep.subr.mxu0 0.0
    %1090 = vmatpush2.msra.mxu0 0.0
    %1091 = vmatprep.subr.mxu0 0.0
    %1092 = vmatpush2.msra.mxu0 0.0
    %1093 = vmatprep.subr.mxu0 0.0
    %1094 = vmatpush2.msra.mxu0 0.0
    %1095 = vmatprep.mubr.f32.mxu0 0.0
    %1096 = vmatmul.mubr.f32.gmra.mxu0 %v1026
    %v1097 = vpop.f32.mrf.mxu0
    %v1098 = vadd.f32 %v1016, %v1097
    %v1099 = vpop.f32.mrf.mxu0
    %v1100 = vadd.f32 %v1020, %v1099
    %1101 = vmatprep.mubr.f32.mxu0 0.0
    %1102 = vmatmul.mubr.f32.gmra.mxu0 %v1029
    %v1103 = vpop.f32.mrf.mxu0
    %v1104 = vadd.f32 %v1016, %v1103
    %v1105 = vpop.f32.mrf.mxu0
    %v1106 = vadd.f32 %v1020, %v1105
    %1107 = vdwg.mxu0
    %1108 = vmatprep.subr.mxu0 0.0
    %1109 = vmatpush1.msra.mxu0 0.0
    %1110 = vmatprep.subr.mxu0 0.0
    %1111 = vmatpush1.msra.mxu0 0.0
    %1112 = vmatprep.subr.mxu0 0.0
    %1113 = vmatpush1.msra.mxu0 0.0
    %1114 = vmatprep.subr.mxu0 0.0
    %1115 = vmatpush1.msra.mxu0 0.0
    %1116 = vmatprep.subr.mxu0 0.0
    %1117 = vmatpush1.msra.mxu0 0.0
    %1118 = vmatprep.subr.mxu0 0.0
    %1119 = vmatpush1.msra.mxu0 0.0
    %1120 = vmatprep.subr.mxu0 0.0
    %1121 = vmatpush1.msra.mxu0 0.0
    %1122 = vmatprep.subr.mxu0 0.0
    %1123 = vmatpush1.msra.mxu0 0.0
    %1124 = vmatprep.subr.mxu0 0.0
    %1125 = vmatpush1.msra.mxu0 0.0
    %1126 = vmatprep.subr.mxu0 0.0
    %1127 = vmatpush1.msra.mxu0 0.0
    %1128 = vmatprep.subr.mxu0 0.0
    %1129 = vmatpush1.msra.mxu0 0.0
    %1130 = vmatprep.subr.mxu0 0.0
    %1131 = vmatpush1.msra.mxu0 0.0
    %1132 = vmatprep.subr.mxu0 0.0
    %1133 = vmatpush1.msra.mxu0 %v968
    %1134 = vmatprep.subr.mxu0 0.0
    %1135 = vmatpush1.msra.mxu0 %v963
    %1136 = vmatprep.subr.mxu0 0.0
    %1137 = vmatpush1.msra.mxu0 %v958
    %1138 = vmatprep.subr.mxu0 0.0
    %1139 = vmatpush1.msra.mxu0 %v953
    %1140 = vmatprep.subr.mxu0 0.0
    %1141 = vmatpush2.msra.mxu0 0.0
    %1142 = vmatprep.subr.mxu0 0.0
    %1143 = vmatpush2.msra.mxu0 0.0
    %1144 = vmatprep.subr.mxu0 0.0
    %1145 = vmatpush2.msra.mxu0 0.0
    %1146 = vmatprep.subr.mxu0 0.0
    %1147 = vmatpush2.msra.mxu0 0.0
    %1148 = vmatprep.subr.mxu0 0.0
    %1149 = vmatpush2.msra.mxu0 0.0
    %1150 = vmatprep.subr.mxu0 0.0
    %1151 = vmatpush2.msra.mxu0 0.0
    %1152 = vmatprep.subr.mxu0 0.0
    %1153 = vmatpush2.msra.mxu0 0.0
    %1154 = vmatprep.subr.mxu0 0.0
    %1155 = vmatpush2.msra.mxu0 0.0
    %1156 = vmatprep.subr.mxu0 0.0
    %1157 = vmatpush2.msra.mxu0 0.0
    %1158 = vmatprep.subr.mxu0 0.0
    %1159 = vmatpush2.msra.mxu0 0.0
    %1160 = vmatprep.subr.mxu0 0.0
    %1161 = vmatpush2.msra.mxu0 0.0
    %1162 = vmatprep.subr.mxu0 0.0
    %1163 = vmatpush2.msra.mxu0 0.0
    %1164 = vmatprep.subr.mxu0 0.0
    %1165 = vmatpush2.msra.mxu0 0.0
    %1166 = vmatprep.subr.mxu0 0.0
    %1167 = vmatpush2.msra.mxu0 0.0
    %1168 = vmatprep.subr.mxu0 0.0
    %1169 = vmatpush2.msra.mxu0 0.0
    %1170 = vmatprep.subr.mxu0 0.0
    %1171 = vmatpush2.msra.mxu0 0.0
    %1172 = vmatprep.mubr.f32.mxu0 0.0
    %1173 = vmatmul.mubr.f32.gmra.mxu0 %v1026
    %v1174 = vpop.f32.mrf.mxu0
    %v1175 = vadd.f32 %v1024, %v1174
    %v1176 = vpop.f32.mrf.mxu0
    %1177 = vmatprep.mubr.f32.mxu0 0.0
    %1178 = vmatmul.mubr.f32.gmra.mxu0 %v1029
    %v1179 = vpop.f32.mrf.mxu0
    %v1180 = vadd.f32 %v1024, %v1179
    %v1181 = vpop.f32.mrf.mxu0
    %1182 = vdwg.mxu0
    %v1183 = vmul.f32 %v1100, %v92
    %v1184 = vmul.f32 %v1106, %v93
    %v1185 = vmul.f32 %v1100, %v94
    %v1186 = vmul.f32 %v1106, %v95
    %v1187 = vmul.f32 %v1100, %v96
    %v1188 = vmul.f32 %v1106, %v97
    %v1189 = vmul.f32 %v1100, %v98
    %v1190 = vmul.f32 %v1106, %v99
    %v1191 = vmul.f32 %v1175, %v92
    %v1192 = vmul.f32 %v1180, %v93
    %v1193 = vmul.f32 %v1175, %v94
    %v1194 = vmul.f32 %v1180, %v95
    %v1195 = vmul.f32 %v1175, %v96
    %v1196 = vmul.f32 %v1180, %v97
    %v1197 = vmul.f32 %v1175, %v98
    %v1198 = vmul.f32 %v1180, %v99
    %v1200 = vsel %vm131, %v1098, 0
    %v1203 = vsel %vm131, %v1104, 0
    %v1206 = vsel %vm131, %v1183, 0
    %v1209 = vsel %vm131, %v1184, 0
    %v1212 = vsel %vm131, %v1185, 0
    %v1215 = vsel %vm131, %v1186, 0
    %v1218 = vsel %vm131, %v1187, 0
    %v1221 = vsel %vm131, %v1188, 0
    %v1224 = vsel %vm131, %v1189, 0
    %v1227 = vsel %vm131, %v1190, 0
    %1229 = vmatprep.subr.mxu0 0.0
    %1230 = vmatpush1.xpose.msra.mxu0 0.0
    %1231 = vmatprep.subr.mxu0 0.0
    %1232 = vmatpush1.xpose.msra.mxu0 0.0
    %1233 = vmatprep.subr.mxu0 0.0
    %1234 = vmatpush1.xpose.msra.mxu0 0.0
    %1235 = vmatprep.subr.mxu0 0.0
    %1236 = vmatpush1.xpose.msra.mxu0 0.0
    %1237 = vmatprep.subr.mxu0 0.0
    %1238 = vmatpush1.xpose.msra.mxu0 0.0
    %1239 = vmatprep.subr.mxu0 0.0
    %1240 = vmatpush1.xpose.msra.mxu0 0.0
    %1241 = vmatprep.subr.mxu0 0.0
    %1242 = vmatpush1.xpose.msra.mxu0 0.0
    %1243 = vmatprep.subr.mxu0 0.0
    %1244 = vmatpush1.xpose.msra.mxu0 0.0
    %1245 = vmatprep.subr.mxu0 0.0
    %1246 = vmatpush1.xpose.msra.mxu0 %v1227
    %1247 = vmatprep.subr.mxu0 0.0
    %1248 = vmatpush1.xpose.msra.mxu0 %v1224
    %1249 = vmatprep.subr.mxu0 0.0
    %1250 = vmatpush1.xpose.msra.mxu0 %v1221
    %1251 = vmatprep.subr.mxu0 0.0
    %1252 = vmatpush1.xpose.msra.mxu0 %v1218
    %1253 = vmatprep.subr.mxu0 0.0
    %1254 = vmatpush1.xpose.msra.mxu0 %v1215
    %1255 = vmatprep.subr.mxu0 0.0
    %1256 = vmatpush1.xpose.msra.mxu0 %v1212
    %1257 = vmatprep.subr.mxu0 0.0
    %1258 = vmatpush1.xpose.msra.mxu0 %v1209
    %1259 = vmatprep.subr.mxu0 0.0
    %1260 = vmatpush1.xpose.msra.mxu0 %v1206
    %1261 = vmatprep.subr.mxu0 0.0
    %1262 = vmatpush2.xpose.msra.mxu0 0.0
    %1263 = vmatprep.subr.mxu0 0.0
    %1264 = vmatpush2.xpose.msra.mxu0 0.0
    %1265 = vmatprep.subr.mxu0 0.0
    %1266 = vmatpush2.xpose.msra.mxu0 0.0
    %1267 = vmatprep.subr.mxu0 0.0
    %1268 = vmatpush2.xpose.msra.mxu0 0.0
    %1269 = vmatprep.subr.mxu0 0.0
    %1270 = vmatpush2.xpose.msra.mxu0 0.0
    %1271 = vmatprep.subr.mxu0 0.0
    %1272 = vmatpush2.xpose.msra.mxu0 0.0
    %1273 = vmatprep.subr.mxu0 0.0
    %1274 = vmatpush2.xpose.msra.mxu0 0.0
    %1275 = vmatprep.subr.mxu0 0.0
    %1276 = vmatpush2.xpose.msra.mxu0 0.0
    %1277 = vmatprep.subr.mxu0 0.0
    %1278 = vmatpush2.xpose.msra.mxu0 0.0
    %1279 = vmatprep.subr.mxu0 0.0
    %1280 = vmatpush2.xpose.msra.mxu0 0.0
    %1281 = vmatprep.subr.mxu0 0.0
    %1282 = vmatpush2.xpose.msra.mxu0 0.0
    %1283 = vmatprep.subr.mxu0 0.0
    %1284 = vmatpush2.xpose.msra.mxu0 0.0
    %1285 = vmatprep.subr.mxu0 0.0
    %1286 = vmatpush2.xpose.msra.mxu0 0.0
    %1287 = vmatprep.subr.mxu0 0.0
    %1288 = vmatpush2.xpose.msra.mxu0 0.0
    %1289 = vmatprep.subr.mxu0 0.0
    %1290 = vmatpush2.xpose.msra.mxu0 0.0
    %1291 = vmatprep.subr.mxu0 0.0
    %1292 = vmatpush2.xpose.msra.mxu0 0.0
    %1293 = vmatprep.mubr.f32.mxu0 0.0
    %1294 = vmatmul.mubr.f32.gmra.mxu0 %v1200
    %v1295 = vpop.f32.mrf.mxu0
    %v1296 = vadd.f32 %v90, %v1295
    %v1297 = vpop.f32.mrf.mxu0
    %1298 = vmatprep.mubr.f32.mxu0 0.0
    %1299 = vmatmul.mubr.f32.gmra.mxu0 %v1203
    %v1300 = vpop.f32.mrf.mxu0
    %v1301 = vadd.f32 %v91, %v1300
    %v1302 = vpop.f32.mrf.mxu0
    %1303 = vdwg.mxu0
    %v1304 = vsel %vm462, %v1296, -inf
    %1305 = vmax.xlane.f32.xlu0 %v1304
    %v1306 = vpop.xlane.xlu0 %1305
    %v1307 = vsel %vm462, %v1301, -inf
    %1308 = vmax.xlane.f32.xlu0 %v1307
    %v1309 = vpop.xlane.xlu0 %1308
    %v1310 = vsub.f32 %v1296, %v1306
    %v1311 = vsub.f32 %v1301, %v1309
    %v1312 = vmul.f32 %v1310, 1.442695
    %v1313 = vpow.pop %v1312
    %v1314 = vmul.f32 %v1311, 1.442695
    %v1315 = vpow.pop %v1314
    %v1317 = vsel %vm462, %v1313, 0
    %v1320 = vsel %vm462, %v1315, 0
    %1322 = vmatprep.subr.mxu0 0.0
    %1323 = vmatpush1.msra.mxu0 0.0
    %1324 = vmatprep.subr.mxu0 0.0
    %1325 = vmatpush1.msra.mxu0 0.0
    %1326 = vmatprep.subr.mxu0 0.0
    %1327 = vmatpush1.msra.mxu0 0.0
    %1328 = vmatprep.subr.mxu0 0.0
    %1329 = vmatpush1.msra.mxu0 0.0
    %1330 = vmatprep.subr.mxu0 0.0
    %1331 = vmatpush1.msra.mxu0 0.0
    %1332 = vmatprep.subr.mxu0 0.0
    %1333 = vmatpush1.msra.mxu0 0.0
    %1334 = vmatprep.subr.mxu0 0.0
    %1335 = vmatpush1.msra.mxu0 0.0
    %1336 = vmatprep.subr.mxu0 0.0
    %1337 = vmatpush1.msra.mxu0 0.0
    %1338 = vmatprep.subr.mxu0 0.0
    %1339 = vmatpush1.msra.mxu0 %v107
    %1340 = vmatprep.subr.mxu0 0.0
    %1341 = vmatpush1.msra.mxu0 %v106
    %1342 = vmatprep.subr.mxu0 0.0
    %1343 = vmatpush1.msra.mxu0 %v105
    %1344 = vmatprep.subr.mxu0 0.0
    %1345 = vmatpush1.msra.mxu0 %v104
    %1346 = vmatprep.subr.mxu0 0.0
    %1347 = vmatpush1.msra.mxu0 %v103
    %1348 = vmatprep.subr.mxu0 0.0
    %1349 = vmatpush1.msra.mxu0 %v102
    %1350 = vmatprep.subr.mxu0 0.0
    %1351 = vmatpush1.msra.mxu0 %v101
    %1352 = vmatprep.subr.mxu0 0.0
    %1353 = vmatpush1.msra.mxu0 %v100
    %1354 = vmatprep.subr.mxu0 0.0
    %1355 = vmatpush2.msra.mxu0 0.0
    %1356 = vmatprep.subr.mxu0 0.0
    %1357 = vmatpush2.msra.mxu0 0.0
    %1358 = vmatprep.subr.mxu0 0.0
    %1359 = vmatpush2.msra.mxu0 0.0
    %1360 = vmatprep.subr.mxu0 0.0
    %1361 = vmatpush2.msra.mxu0 0.0
    %1362 = vmatprep.subr.mxu0 0.0
    %1363 = vmatpush2.msra.mxu0 0.0
    %1364 = vmatprep.subr.mxu0 0.0
    %1365 = vmatpush2.msra.mxu0 0.0
    %1366 = vmatprep.subr.mxu0 0.0
    %1367 = vmatpush2.msra.mxu0 0.0
    %1368 = vmatprep.subr.mxu0 0.0
    %1369 = vmatpush2.msra.mxu0 0.0
    %1370 = vmatprep.subr.mxu0 0.0
    %1371 = vmatpush2.msra.mxu0 0.0
    %1372 = vmatprep.subr.mxu0 0.0
    %1373 = vmatpush2.msra.mxu0 0.0
    %1374 = vmatprep.subr.mxu0 0.0
    %1375 = vmatpush2.msra.mxu0 0.0
    %1376 = vmatprep.subr.mxu0 0.0
    %1377 = vmatpush2.msra.mxu0 0.0
    %1378 = vmatprep.subr.mxu0 0.0
    %1379 = vmatpush2.msra.mxu0 0.0
    %1380 = vmatprep.subr.mxu0 0.0
    %1381 = vmatpush2.msra.mxu0 0.0
    %1382 = vmatprep.subr.mxu0 0.0
    %1383 = vmatpush2.msra.mxu0 0.0
    %1384 = vmatprep.subr.mxu0 0.0
    %1385 = vmatpush2.msra.mxu0 0.0
    %1386 = vmatprep.mubr.f32.mxu0 0.0
    %1387 = vmatmul.mubr.f32.gmra.mxu0 %v1317
    %v1388 = vpop.f32.mrf.mxu0
    %v1389 = vadd.f32 0.0, %v1388
    %v1390 = vpop.f32.mrf.mxu0
    %1391 = vmatprep.mubr.f32.mxu0 0.0
    %1392 = vmatmul.mubr.f32.gmra.mxu0 %v1320
    %v1393 = vpop.f32.mrf.mxu0
    %v1394 = vadd.f32 0.0, %v1393
    %v1395 = vpop.f32.mrf.mxu0
    %1396 = vdwg.mxu0
    %v1397 = vrcp.pop %v1389
    %v1398 = vrcp.pop %v1394
    %v1399 = vmul.f32 %v1313, %v1397
    %v1400 = vmul.f32 %v1315, %v1398
    %v1402 = vsel %vm462, %v1399, 0
    %v1405 = vsel %vm462, %v1400, 0
    %1407 = vmatprep.subr.mxu0 0.0
    %1408 = vmatpush1.msra.mxu0 0.0
    %1409 = vmatprep.subr.mxu0 0.0
    %1410 = vmatpush1.msra.mxu0 0.0
    %1411 = vmatprep.subr.mxu0 0.0
    %1412 = vmatpush1.msra.mxu0 0.0
    %1413 = vmatprep.subr.mxu0 0.0
    %1414 = vmatpush1.msra.mxu0 0.0
    %1415 = vmatprep.subr.mxu0 0.0
    %1416 = vmatpush1.msra.mxu0 0.0
    %1417 = vmatprep.subr.mxu0 0.0
    %1418 = vmatpush1.msra.mxu0 0.0
    %1419 = vmatprep.subr.mxu0 0.0
    %1420 = vmatpush1.msra.mxu0 0.0
    %1421 = vmatprep.subr.mxu0 0.0
    %1422 = vmatpush1.msra.mxu0 0.0
    %1423 = vmatprep.subr.mxu0 0.0
    %1424 = vmatpush1.msra.mxu0 %v1198
    %1425 = vmatprep.subr.mxu0 0.0
    %1426 = vmatpush1.msra.mxu0 %v1197
    %1427 = vmatprep.subr.mxu0 0.0
    %1428 = vmatpush1.msra.mxu0 %v1196
    %1429 = vmatprep.subr.mxu0 0.0
    %1430 = vmatpush1.msra.mxu0 %v1195
    %1431 = vmatprep.subr.mxu0 0.0
    %1432 = vmatpush1.msra.mxu0 %v1194
    %1433 = vmatprep.subr.mxu0 0.0
    %1434 = vmatpush1.msra.mxu0 %v1193
    %1435 = vmatprep.subr.mxu0 0.0
    %1436 = vmatpush1.msra.mxu0 %v1192
    %1437 = vmatprep.subr.mxu0 0.0
    %1438 = vmatpush1.msra.mxu0 %v1191
    %1439 = vmatprep.subr.mxu0 0.0
    %1440 = vmatpush2.msra.mxu0 0.0
    %1441 = vmatprep.subr.mxu0 0.0
    %1442 = vmatpush2.msra.mxu0 0.0
    %1443 = vmatprep.subr.mxu0 0.0
    %1444 = vmatpush2.msra.mxu0 0.0
    %1445 = vmatprep.subr.mxu0 0.0
    %1446 = vmatpush2.msra.mxu0 0.0
    %1447 = vmatprep.subr.mxu0 0.0
    %1448 = vmatpush2.msra.mxu0 0.0
    %1449 = vmatprep.subr.mxu0 0.0
    %1450 = vmatpush2.msra.mxu0 0.0
    %1451 = vmatprep.subr.mxu0 0.0
    %1452 = vmatpush2.msra.mxu0 0.0
    %1453 = vmatprep.subr.mxu0 0.0
    %1454 = vmatpush2.msra.mxu0 0.0
    %1455 = vmatprep.subr.mxu0 0.0
    %1456 = vmatpush2.msra.mxu0 0.0
    %1457 = vmatprep.subr.mxu0 0.0
    %1458 = vmatpush2.msra.mxu0 0.0
    %1459 = vmatprep.subr.mxu0 0.0
    %1460 = vmatpush2.msra.mxu0 0.0
    %1461 = vmatprep.subr.mxu0 0.0
    %1462 = vmatpush2.msra.mxu0 0.0
    %1463 = vmatprep.subr.mxu0 0.0
    %1464 = vmatpush2.msra.mxu0 0.0
    %1465 = vmatprep.subr.mxu0 0.0
    %1466 = vmatpush2.msra.mxu0 0.0
    %1467 = vmatprep.subr.mxu0 0.0
    %1468 = vmatpush2.msra.mxu0 0.0
    %1469 = vmatprep.subr.mxu0 0.0
    %1470 = vmatpush2.msra.mxu0 0.0
    %1471 = vmatprep.mubr.f32.mxu0 0.0
    %1472 = vmatmul.mubr.f32.gmra.mxu0 %v1402
    %v1473 = vpop.f32.mrf.mxu0
    %v1474 = vadd.f32 0.0, %v1473
    %v1475 = vpop.f32.mrf.mxu0
    %1476 = vmatprep.mubr.f32.mxu0 0.0
    %1477 = vmatmul.mubr.f32.gmra.mxu0 %v1405
    %v1478 = vpop.f32.mrf.mxu0
    %v1479 = vadd.f32 0.0, %v1478
    %v1480 = vpop.f32.mrf.mxu0
    %1481 = vdwg.mxu0
    %v1482 = vlaneseq
    %v1483 = vshrl.u32 %v1482, 7
    %v1484 = vsub.s32 6, %v1483
    %v1485 = vrot.slane %v972, %v1484
    %v1487 = vsel %vm131, %v1474, 0
    %v1490 = vsel %vm131, %v1479, 0
    %1492 = vmatprep.subr.mxu0 0.0
    %1493 = vmatpush1.msra.mxu0 0.0
    %1494 = vmatprep.subr.mxu0 0.0
    %1495 = vmatpush1.msra.mxu0 0.0
    %1496 = vmatprep.subr.mxu0 0.0
    %1497 = vmatpush1.msra.mxu0 0.0
    %1498 = vmatprep.subr.mxu0 0.0
    %1499 = vmatpush1.msra.mxu0 0.0
    %1500 = vmatprep.subr.mxu0 0.0
    %1501 = vmatpush1.msra.mxu0 0.0
    %1502 = vmatprep.subr.mxu0 0.0
    %1503 = vmatpush1.msra.mxu0 0.0
    %1504 = vmatprep.subr.mxu0 0.0
    %1505 = vmatpush1.msra.mxu0 0.0
    %1506 = vmatprep.subr.mxu0 0.0
    %1507 = vmatpush1.msra.mxu0 0.0
    %1508 = vmatprep.subr.mxu0 0.0
    %1509 = vmatpush1.msra.mxu0 0.0
    %1510 = vmatprep.subr.mxu0 0.0
    %1511 = vmatpush1.msra.mxu0 0.0
    %1512 = vmatprep.subr.mxu0 0.0
    %1513 = vmatpush1.msra.mxu0 0.0
    %1514 = vmatprep.subr.mxu0 0.0
    %1515 = vmatpush1.msra.mxu0 0.0
    %1516 = vmatprep.subr.mxu0 0.0
    %1517 = vmatpush1.msra.mxu0 %v969
    %1518 = vmatprep.subr.mxu0 0.0
    %1519 = vmatpush1.msra.mxu0 %v964
    %1520 = vmatprep.subr.mxu0 0.0
    %1521 = vmatpush1.msra.mxu0 %v959
    %1522 = vmatprep.subr.mxu0 0.0
    %1523 = vmatpush1.msra.mxu0 %v954
    %1524 = vmatprep.subr.mxu0 0.0
    %1525 = vmatpush2.msra.mxu0 0.0
    %1526 = vmatprep.subr.mxu0 0.0
    %1527 = vmatpush2.msra.mxu0 0.0
    %1528 = vmatprep.subr.mxu0 0.0
    %1529 = vmatpush2.msra.mxu0 0.0
    %1530 = vmatprep.subr.mxu0 0.0
    %1531 = vmatpush2.msra.mxu0 0.0
    %1532 = vmatprep.subr.mxu0 0.0
    %1533 = vmatpush2.msra.mxu0 0.0
    %1534 = vmatprep.subr.mxu0 0.0
    %1535 = vmatpush2.msra.mxu0 0.0
    %1536 = vmatprep.subr.mxu0 0.0
    %1537 = vmatpush2.msra.mxu0 0.0
    %1538 = vmatprep.subr.mxu0 0.0
    %1539 = vmatpush2.msra.mxu0 0.0
    %1540 = vmatprep.subr.mxu0 0.0
    %1541 = vmatpush2.msra.mxu0 0.0
    %1542 = vmatprep.subr.mxu0 0.0
    %1543 = vmatpush2.msra.mxu0 0.0
    %1544 = vmatprep.subr.mxu0 0.0
    %1545 = vmatpush2.msra.mxu0 0.0
    %1546 = vmatprep.subr.mxu0 0.0
    %1547 = vmatpush2.msra.mxu0 0.0
    %1548 = vmatprep.subr.mxu0 0.0
    %1549 = vmatpush2.msra.mxu0 0.0
    %1550 = vmatprep.subr.mxu0 0.0
    %1551 = vmatpush2.msra.mxu0 0.0
    %1552 = vmatprep.subr.mxu0 0.0
    %1553 = vmatpush2.msra.mxu0 0.0
    %1554 = vmatprep.subr.mxu0 0.0
    %1555 = vmatpush2.msra.mxu0 0.0
    %1556 = vmatprep.mubr.f32.mxu0 0.0
    %1557 = vmatmul.mubr.f32.gmra.mxu0 %v1487
    %v1558 = vpop.f32.mrf.mxu0
    %v1559 = vadd.f32 %v1485, %v1558
    %v1560 = vpop.f32.mrf.mxu0
    %1561 = vmatprep.mubr.f32.mxu0 0.0
    %1562 = vmatmul.mubr.f32.gmra.mxu0 %v1490
    %v1563 = vpop.f32.mrf.mxu0
    %v1564 = vadd.f32 %v1485, %v1563
    %v1565 = vpop.f32.mrf.mxu0
    %1566 = vdwg.mxu0
    %v1567 = vadd.f32 %v948, %v1559
    %v1568 = vadd.f32 %v949, %v1564
    %v1569 = vsel %vm131, %v1567, 0.0
    %1570 = vadd.xlane.f32.xlu0 %v1569
    %v1571 = vpop.xlane.xlu0 %1570
    %v1572 = vsel %vm131, %v1568, 0.0
    %1573 = vadd.xlane.f32.xlu0 %v1572
    %v1574 = vpop.xlane.xlu0 %1573
    %v1575 = vmul.f32 %v1571, %v138
    %v1576 = vmul.f32 %v1574, %v138
    %v1577 = vsub.f32 %v1567, %v1575
    %v1578 = vsub.f32 %v1568, %v1576
    %v1579 = vmul.f32 %v1577, %v1577
    %v1580 = vmul.f32 %v1578, %v1578
    %v1581 = vsel %vm131, %v1579, 0.0
    %1582 = vadd.xlane.f32.xlu0 %v1581
    %v1583 = vpop.xlane.xlu0 %1582
    %v1584 = vsel %vm131, %v1580, 0.0
    %1585 = vadd.xlane.f32.xlu0 %v1584
    %v1586 = vpop.xlane.xlu0 %1585
    %v1587 = vmul.f32 %v1583, %v138
    %v1588 = vmul.f32 %v1586, %v138
    %v1589 = vadd.f32 %v1587, 1e-05
    %v1590 = vadd.f32 %v1588, 1e-05
    %v1591 = vrsqrt.pop %v1589
    %v1592 = vrsqrt.pop %v1590
    %v1593 = vmul.f32 %v1577, %v1591
    %v1594 = vmul.f32 %v1578, %v1592
    %v1595 = vlaneseq
    %v1596 = vshrl.u32 %v1595, 7
    %v1597 = vsub.s32 4, %v1596
    %v1598 = vrot.slane %v972, %v1597
    %v1599 = vmul.f32 %v1593, %v1598
    %v1600 = vmul.f32 %v1594, %v1598
    %v1601 = vlaneseq
    %v1602 = vshrl.u32 %v1601, 7
    %v1603 = vsub.s32 5, %v1602
    %v1604 = vrot.slane %v972, %v1603
    %v1605 = vadd.f32 %v1599, %v1604
    %v1606 = vadd.f32 %v1600, %v1604
    %v1607 = vlaneseq
    %v1608 = vshrl.u32 %v1607, 7
    %v1609 = vsub.s32 1, %v1608
    %v1610 = vrot.slane %v972, %v1609
    %v1612 = vsel %vm131, %v1605, 0
    %v1615 = vsel %vm131, %v1606, 0
    %1617 = vmatprep.subr.mxu0 0.0
    %1618 = vmatpush1.msra.mxu0 0.0
    %1619 = vmatprep.subr.mxu0 0.0
    %1620 = vmatpush1.msra.mxu0 0.0
    %1621 = vmatprep.subr.mxu0 0.0
    %1622 = vmatpush1.msra.mxu0 0.0
    %1623 = vmatprep.subr.mxu0 0.0
    %1624 = vmatpush1.msra.mxu0 0.0
    %1625 = vmatprep.subr.mxu0 0.0
    %1626 = vmatpush1.msra.mxu0 0.0
    %1627 = vmatprep.subr.mxu0 0.0
    %1628 = vmatpush1.msra.mxu0 0.0
    %1629 = vmatprep.subr.mxu0 0.0
    %1630 = vmatpush1.msra.mxu0 0.0
    %1631 = vmatprep.subr.mxu0 0.0
    %1632 = vmatpush1.msra.mxu0 0.0
    %1633 = vmatprep.subr.mxu0 0.0
    %1634 = vmatpush1.msra.mxu0 0.0
    %1635 = vmatprep.subr.mxu0 0.0
    %1636 = vmatpush1.msra.mxu0 0.0
    %1637 = vmatprep.subr.mxu0 0.0
    %1638 = vmatpush1.msra.mxu0 0.0
    %1639 = vmatprep.subr.mxu0 0.0
    %1640 = vmatpush1.msra.mxu0 0.0
    %1641 = vmatprep.subr.mxu0 0.0
    %1642 = vmatpush1.msra.mxu0 %v970
    %1643 = vmatprep.subr.mxu0 0.0
    %1644 = vmatpush1.msra.mxu0 %v965
    %1645 = vmatprep.subr.mxu0 0.0
    %1646 = vmatpush1.msra.mxu0 %v960
    %1647 = vmatprep.subr.mxu0 0.0
    %1648 = vmatpush1.msra.mxu0 %v955
    %1649 = vmatprep.subr.mxu0 0.0
    %1650 = vmatpush2.msra.mxu0 0.0
    %1651 = vmatprep.subr.mxu0 0.0
    %1652 = vmatpush2.msra.mxu0 0.0
    %1653 = vmatprep.subr.mxu0 0.0
    %1654 = vmatpush2.msra.mxu0 0.0
    %1655 = vmatprep.subr.mxu0 0.0
    %1656 = vmatpush2.msra.mxu0 0.0
    %1657 = vmatprep.subr.mxu0 0.0
    %1658 = vmatpush2.msra.mxu0 0.0
    %1659 = vmatprep.subr.mxu0 0.0
    %1660 = vmatpush2.msra.mxu0 0.0
    %1661 = vmatprep.subr.mxu0 0.0
    %1662 = vmatpush2.msra.mxu0 0.0
    %1663 = vmatprep.subr.mxu0 0.0
    %1664 = vmatpush2.msra.mxu0 0.0
    %1665 = vmatprep.subr.mxu0 0.0
    %1666 = vmatpush2.msra.mxu0 0.0
    %1667 = vmatprep.subr.mxu0 0.0
    %1668 = vmatpush2.msra.mxu0 0.0
    %1669 = vmatprep.subr.mxu0 0.0
    %1670 = vmatpush2.msra.mxu0 0.0
    %1671 = vmatprep.subr.mxu0 0.0
    %1672 = vmatpush2.msra.mxu0 0.0
    %1673 = vmatprep.subr.mxu0 0.0
    %1674 = vmatpush2.msra.mxu0 0.0
    %1675 = vmatprep.subr.mxu0 0.0
    %1676 = vmatpush2.msra.mxu0 0.0
    %1677 = vmatprep.subr.mxu0 0.0
    %1678 = vmatpush2.msra.mxu0 0.0
    %1679 = vmatprep.subr.mxu0 0.0
    %1680 = vmatpush2.msra.mxu0 0.0
    %1681 = vmatprep.mubr.f32.mxu0 0.0
    %1682 = vmatmul.mubr.f32.gmra.mxu0 %v1612
    %v1683 = vpop.f32.mrf.mxu0
    %v1684 = vadd.f32 %v1610, %v1683
    %v1685 = vpop.f32.mrf.mxu0
    %1686 = vmatprep.mubr.f32.mxu0 0.0
    %1687 = vmatmul.mubr.f32.gmra.mxu0 %v1615
    %v1688 = vpop.f32.mrf.mxu0
    %v1689 = vadd.f32 %v1610, %v1688
    %v1690 = vpop.f32.mrf.mxu0
    %1691 = vdwg.mxu0
    %v1692 = vmax.f32 %v1684, 0.0
    %v1693 = vmax.f32 %v1689, 0.0
    %s1694 = scalar_lea.vmem %s5, 128
    %v1695 = vld [vmem:[%s1694] sm:$0xff]
    %v1696 = vld [vmem:[%s1694 + $0x8] sm:$0xff]
    %v1697 = vld [vmem:[%s1694 + $0x10] sm:$0xff]
    %v1698 = vld [vmem:[%s1694 + $0x18] sm:$0xff]
    %v1699 = vld [vmem:[%s1694 + $0x20] sm:$0xff]
    %v1700 = vld [vmem:[%s1694 + $0x28] sm:$0xff]
    %v1701 = vld [vmem:[%s1694 + $0x30] sm:$0xff]
    %v1702 = vld [vmem:[%s1694 + $0x38] sm:$0xff]
    %v1703 = vld [vmem:[%s1694 + $0x40] sm:$0xff]
    %v1704 = vld [vmem:[%s1694 + $0x48] sm:$0xff]
    %v1705 = vld [vmem:[%s1694 + $0x50] sm:$0xff]
    %v1706 = vld [vmem:[%s1694 + $0x58] sm:$0xff]
    %v1707 = vld [vmem:[%s1694 + $0x60] sm:$0xff]
    %v1708 = vld [vmem:[%s1694 + $0x68] sm:$0xff]
    %v1709 = vld [vmem:[%s1694 + $0x70] sm:$0xff]
    %v1710 = vld [vmem:[%s1694 + $0x78] sm:$0xff]
    %v1711 = vlaneseq
    %v1712 = vshrl.u32 %v1711, 7
    %v1713 = vsub.s32 7, %v1712
    %v1714 = vrot.slane %v972, %v1713
    %1715 = vmatprep.subr.mxu0 0.0
    %1716 = vmatpush1.msra.mxu0 %v1710
    %1717 = vmatprep.subr.mxu0 0.0
    %1718 = vmatpush1.msra.mxu0 %v1709
    %1719 = vmatprep.subr.mxu0 0.0
    %1720 = vmatpush1.msra.mxu0 %v1708
    %1721 = vmatprep.subr.mxu0 0.0
    %1722 = vmatpush1.msra.mxu0 %v1707
    %1723 = vmatprep.subr.mxu0 0.0
    %1724 = vmatpush1.msra.mxu0 %v1706
    %1725 = vmatprep.subr.mxu0 0.0
    %1726 = vmatpush1.msra.mxu0 %v1705
    %1727 = vmatprep.subr.mxu0 0.0
    %1728 = vmatpush1.msra.mxu0 %v1704
    %1729 = vmatprep.subr.mxu0 0.0
    %1730 = vmatpush1.msra.mxu0 %v1703
    %1731 = vmatprep.subr.mxu0 0.0
    %1732 = vmatpush1.msra.mxu0 %v1702
    %1733 = vmatprep.subr.mxu0 0.0
    %1734 = vmatpush1.msra.mxu0 %v1701
    %1735 = vmatprep.subr.mxu0 0.0
    %1736 = vmatpush1.msra.mxu0 %v1700
    %1737 = vmatprep.subr.mxu0 0.0
    %1738 = vmatpush1.msra.mxu0 %v1699
    %1739 = vmatprep.subr.mxu0 0.0
    %1740 = vmatpush1.msra.mxu0 %v1698
    %1741 = vmatprep.subr.mxu0 0.0
    %1742 = vmatpush1.msra.mxu0 %v1697
    %1743 = vmatprep.subr.mxu0 0.0
    %1744 = vmatpush1.msra.mxu0 %v1696
    %1745 = vmatprep.subr.mxu0 0.0
    %1746 = vmatpush1.msra.mxu0 %v1695
    %1747 = vmatprep.subr.mxu0 0.0
    %1748 = vmatpush2.msra.mxu0 0.0
    %1749 = vmatprep.subr.mxu0 0.0
    %1750 = vmatpush2.msra.mxu0 0.0
    %1751 = vmatprep.subr.mxu0 0.0
    %1752 = vmatpush2.msra.mxu0 0.0
    %1753 = vmatprep.subr.mxu0 0.0
    %1754 = vmatpush2.msra.mxu0 0.0
    %1755 = vmatprep.subr.mxu0 0.0
    %1756 = vmatpush2.msra.mxu0 0.0
    %1757 = vmatprep.subr.mxu0 0.0
    %1758 = vmatpush2.msra.mxu0 0.0
    %1759 = vmatprep.subr.mxu0 0.0
    %1760 = vmatpush2.msra.mxu0 0.0
    %1761 = vmatprep.subr.mxu0 0.0
    %1762 = vmatpush2.msra.mxu0 0.0
    %1763 = vmatprep.subr.mxu0 0.0
    %1764 = vmatpush2.msra.mxu0 0.0
    %1765 = vmatprep.subr.mxu0 0.0
    %1766 = vmatpush2.msra.mxu0 0.0
    %1767 = vmatprep.subr.mxu0 0.0
    %1768 = vmatpush2.msra.mxu0 0.0
    %1769 = vmatprep.subr.mxu0 0.0
    %1770 = vmatpush2.msra.mxu0 0.0
    %1771 = vmatprep.subr.mxu0 0.0
    %1772 = vmatpush2.msra.mxu0 0.0
    %1773 = vmatprep.subr.mxu0 0.0
    %1774 = vmatpush2.msra.mxu0 0.0
    %1775 = vmatprep.subr.mxu0 0.0
    %1776 = vmatpush2.msra.mxu0 0.0
    %1777 = vmatprep.subr.mxu0 0.0
    %1778 = vmatpush2.msra.mxu0 0.0
    %1779 = vmatprep.mubr.f32.mxu0 0.0
    %1780 = vmatmul.mubr.f32.gmra.mxu0 %v1692
    %v1781 = vpop.f32.mrf.mxu0
    %v1782 = vadd.f32 %v1714, %v1781
    %v1783 = vpop.f32.mrf.mxu0
    %1784 = vmatprep.mubr.f32.mxu0 0.0
    %1785 = vmatmul.mubr.f32.gmra.mxu0 %v1693
    %v1786 = vpop.f32.mrf.mxu0
    %v1787 = vadd.f32 %v1714, %v1786
    %v1788 = vpop.f32.mrf.mxu0
    %1789 = vdwg.mxu0
    %v1790 = vadd.f32 %v1567, %v1782
    %v1791 = vadd.f32 %v1568, %v1787
    %v1792 = vld [vmem:[%s8] sm:$0x1]
    %v1793 = vld [vmem:[%s8 + $0x1] sm:$0x1]
    %v1794 = vsel %vm131, %v1790, 0.0
    %1795 = vadd.xlane.f32.xlu0 %v1794
    %v1796 = vpop.xlane.xlu0 %1795
    %v1797 = vsel %vm131, %v1791, 0.0
    %1798 = vadd.xlane.f32.xlu0 %v1797
    %v1799 = vpop.xlane.xlu0 %1798
    %v1800 = vmul.f32 %v1796, %v138
    %v1801 = vmul.f32 %v1799, %v138
    %v1802 = vsub.f32 %v1790, %v1800
    %v1803 = vsub.f32 %v1791, %v1801
    %v1804 = vmul.f32 %v1802, %v1802
    %v1805 = vmul.f32 %v1803, %v1803
    %v1806 = vsel %vm131, %v1804, 0.0
    %1807 = vadd.xlane.f32.xlu0 %v1806
    %v1808 = vpop.xlane.xlu0 %1807
    %v1809 = vsel %vm131, %v1805, 0.0
    %1810 = vadd.xlane.f32.xlu0 %v1809
    %v1811 = vpop.xlane.xlu0 %1810
    %v1812 = vmul.f32 %v1808, %v138
    %v1813 = vmul.f32 %v1811, %v138
    %v1814 = vadd.f32 %v1812, 1e-05
    %v1815 = vadd.f32 %v1813, 1e-05
    %v1816 = vrsqrt.pop %v1814
    %v1817 = vrsqrt.pop %v1815
    %v1818 = vmul.f32 %v1802, %v1816
    %v1819 = vmul.f32 %v1803, %v1817
    %v1820 = vlaneseq
    %v1821 = vshrl.u32 %v1820, 7
    %v1822 = vsub.s32 0, %v1821
    %v1823 = vrot.slane %v1792, %v1822
    %v1824 = vmul.f32 %v1818, %v1823
    %v1825 = vmul.f32 %v1819, %v1823
    %v1826 = vlaneseq
    %v1827 = vshrl.u32 %v1826, 7
    %v1828 = vsub.s32 0, %v1827
    %v1829 = vrot.slane %v1793, %v1828
    %v1830 = vadd.f32 %v1824, %v1829
    %v1831 = vadd.f32 %v1825, %v1829
    %v1832 = vld [vmem:[%s7] sm:$0xff]
    %v1833 = vld [vmem:[%s7 + $0x8] sm:$0xff]
    %v1834 = vld [vmem:[%s7 + $0x10] sm:$0xff]
    %v1835 = vld [vmem:[%s7 + $0x18] sm:$0xff]
    %v1836 = vld [vmem:[%s8 + $0x2] sm:$0x1]
    %v1837 = vlaneseq
    %v1838 = vshrl.u32 %v1837, 7
    %v1839 = vsub.s32 0, %v1838
    %v1840 = vrot.slane %v1836, %v1839
    %v1842 = vsel %vm131, %v1830, 0
    %v1845 = vsel %vm131, %v1831, 0
    %1847 = vmatprep.subr.mxu0 0.0
    %1848 = vmatpush1.msra.mxu0 0.0
    %1849 = vmatprep.subr.mxu0 0.0
    %1850 = vmatpush1.msra.mxu0 0.0
    %1851 = vmatprep.subr.mxu0 0.0
    %1852 = vmatpush1.msra.mxu0 0.0
    %1853 = vmatprep.subr.mxu0 0.0
    %1854 = vmatpush1.msra.mxu0 0.0
    %1855 = vmatprep.subr.mxu0 0.0
    %1856 = vmatpush1.msra.mxu0 0.0
    %1857 = vmatprep.subr.mxu0 0.0
    %1858 = vmatpush1.msra.mxu0 0.0
    %1859 = vmatprep.subr.mxu0 0.0
    %1860 = vmatpush1.msra.mxu0 0.0
    %1861 = vmatprep.subr.mxu0 0.0
    %1862 = vmatpush1.msra.mxu0 0.0
    %1863 = vmatprep.subr.mxu0 0.0
    %1864 = vmatpush1.msra.mxu0 0.0
    %1865 = vmatprep.subr.mxu0 0.0
    %1866 = vmatpush1.msra.mxu0 0.0
    %1867 = vmatprep.subr.mxu0 0.0
    %1868 = vmatpush1.msra.mxu0 0.0
    %1869 = vmatprep.subr.mxu0 0.0
    %1870 = vmatpush1.msra.mxu0 0.0
    %1871 = vmatprep.subr.mxu0 0.0
    %1872 = vmatpush1.msra.mxu0 %v1835
    %1873 = vmatprep.subr.mxu0 0.0
    %1874 = vmatpush1.msra.mxu0 %v1834
    %1875 = vmatprep.subr.mxu0 0.0
    %1876 = vmatpush1.msra.mxu0 %v1833
    %1877 = vmatprep.subr.mxu0 0.0
    %1878 = vmatpush1.msra.mxu0 %v1832
    %1879 = vmatprep.subr.mxu0 0.0
    %1880 = vmatpush2.msra.mxu0 0.0
    %1881 = vmatprep.subr.mxu0 0.0
    %1882 = vmatpush2.msra.mxu0 0.0
    %1883 = vmatprep.subr.mxu0 0.0
    %1884 = vmatpush2.msra.mxu0 0.0
    %1885 = vmatprep.subr.mxu0 0.0
    %1886 = vmatpush2.msra.mxu0 0.0
    %1887 = vmatprep.subr.mxu0 0.0
    %1888 = vmatpush2.msra.mxu0 0.0
    %1889 = vmatprep.subr.mxu0 0.0
    %1890 = vmatpush2.msra.mxu0 0.0
    %1891 = vmatprep.subr.mxu0 0.0
    %1892 = vmatpush2.msra.mxu0 0.0
    %1893 = vmatprep.subr.mxu0 0.0
    %1894 = vmatpush2.msra.mxu0 0.0
    %1895 = vmatprep.subr.mxu0 0.0
    %1896 = vmatpush2.msra.mxu0 0.0
    %1897 = vmatprep.subr.mxu0 0.0
    %1898 = vmatpush2.msra.mxu0 0.0
    %1899 = vmatprep.subr.mxu0 0.0
    %1900 = vmatpush2.msra.mxu0 0.0
    %1901 = vmatprep.subr.mxu0 0.0
    %1902 = vmatpush2.msra.mxu0 0.0
    %1903 = vmatprep.subr.mxu0 0.0
    %1904 = vmatpush2.msra.mxu0 0.0
    %1905 = vmatprep.subr.mxu0 0.0
    %1906 = vmatpush2.msra.mxu0 0.0
    %1907 = vmatprep.subr.mxu0 0.0
    %1908 = vmatpush2.msra.mxu0 0.0
    %1909 = vmatprep.subr.mxu0 0.0
    %1910 = vmatpush2.msra.mxu0 0.0
    %1911 = vmatprep.mubr.f32.mxu0 0.0
    %1912 = vmatmul.mubr.f32.gmra.mxu0 %v1842
    %v1913 = vpop.f32.mrf.mxu0
    %v1914 = vadd.f32 %v1840, %v1913
    %v1915 = vpop.f32.mrf.mxu0
    %1916 = vmatprep.mubr.f32.mxu0 0.0
    %1917 = vmatmul.mubr.f32.gmra.mxu0 %v1845
    %v1918 = vpop.f32.mrf.mxu0
    %v1919 = vadd.f32 %v1840, %v1918
    %v1920 = vpop.f32.mrf.mxu0
    %1921 = vdwg.mxu0
    %1922 = vst [vmem:[#allocation10] sm:$0xff] %v1914
    %1923 = vst [vmem:[#allocation10 + $0x8] sm:$0xff] %v1919
    // Predicated region
    $region54: #{tpu_custom_call.1} parent=1 // pred_check
      _
    $region55: #{tpu_custom_call.1} parent=1 // pred_check_branch
      %1925 = sbr.rel (0) target = $region57
    $region56: #{tpu_custom_call.1} parent=1 // pred_region
      %s1927 = ssub.s32 256, 256
      %1928 = vsyncadd [#allocation4], %s1927
      %s1929 = sshll.u32 [#allocation10], 4
      %s1930 = int_to_ptr.vmem [resolvable:$true] %s1929
      %1935 = dma.vmem_to_hbm [thread:$0]  %s1930, 256, %s9, [#allocation4], 128, 128, 8
    $region57: #{tpu_custom_call.1} parent=1 // pred_fallthru
      _
    // Predicated region
    $region58: #{tpu_custom_call.1} parent=1 // pred_check
      _
    $region59: #{tpu_custom_call.1} parent=1 // pred_check_branch
      %1937 = sbr.rel (0) target = $region61
    $region60: #{tpu_custom_call.1} parent=1 // pred_region
      %1938 = dma.done [#allocation4], 256
    $region61: #{tpu_custom_call.1} parent=1 // pred_fallthru
      _
    %1939 = vsyncpa [#allocation3], 1
    %1940 = vsyncpa [#allocation6], 1
    %1941 = vsyncpa [#allocation9], 1
    %1942 = vsyncpa [#allocation4], 1

</llo_original>
